<compile_context>
chip_gen: v5e
topology: v5e:2x2
jax: 0.10.0
libtpu: 0.0.40
codegen_flags: <defaults>
</compile_context>

<pallas_src>
import jax
import jax.numpy as jnp
from jax.experimental import pallas as pl
from jax.experimental.pallas import tpu as pltpu

IN_DIM = 28 * 28      # 784 (torch.nn.Flatten of (1, 28, 28))
HID = 512
OUT_DIM = 10
OUT_PAD = 128         # lane-dense output tile; wrapper slices [:, :10]


def _round_up(n, m):
    return (n + m - 1) // m * m


def _pick_tm(b):
    """Batch tile size (Python int, trace-time)."""
    if b <= 128:
        # Tiny batch: single tile, rounded to the f32 sublane multiple.
        return _round_up(max(b, 8), 8)
    # Largest TM in {512, 256, 128} that still gives grid length >= 2, so the
    # parallel batch axis shards across both TensorCores on v7x while
    # amortizing the ~0.35 us per-grid-step overhead on v5e/v6e.
    for tm in (512, 256, 128):
        if pl.cdiv(b, tm) >= 2:
            return tm
    return 128


def mlp_kernel(x_ref, w1_ref, b1_ref, w2_ref, b2_ref, w3_ref, b3_ref, o_ref):
    # In-kernel bf16 cast of the raw f32 pixel tile (saves a wrapper fusion).
    x = x_ref[...].astype(jnp.bfloat16)
    # Layer 1: Linear(784 -> 512) + ReLU   (bf16 MXU matmul, f32 accumulate)
    h1 = jnp.dot(x, w1_ref[...], preferred_element_type=jnp.float32)
    h1 = jnp.maximum(h1 + b1_ref[...].astype(jnp.float32), 0.0).astype(jnp.bfloat16)
    # Layer 2: Linear(512 -> 512) + ReLU
    h2 = jnp.dot(h1, w2_ref[...], preferred_element_type=jnp.float32)
    h2 = jnp.maximum(h2 + b2_ref[...].astype(jnp.float32), 0.0).astype(jnp.bfloat16)
    # Layer 3: Linear(512 -> 128 padded), no activation (logits), bf16 store.
    logits = jnp.dot(h2, w3_ref[...], preferred_element_type=jnp.float32)
    o_ref[...] = (logits + b3_ref[...].astype(jnp.float32)).astype(o_ref.dtype)


def init_params(key):
    # torch.nn.Linear default init (uniform +/- 1/sqrt(fan_in)), computed in
    # f32 then cast to bf16.  Only the last layer's N dim is padded (10->128);
    # padded columns are exactly zero so logits are unchanged.
    ks = jax.random.split(key, 6)

    def lin(kw, kb, fan_in, fan_out, pad_out):
        bound = 1.0 / jnp.sqrt(jnp.float32(fan_in))
        w = jax.random.uniform(kw, (fan_in, fan_out), jnp.float32, -bound, bound)
        b = jax.random.uniform(kb, (1, fan_out), jnp.float32, -bound, bound)
        w = jnp.pad(w, ((0, 0), (0, pad_out - fan_out)))
        b = jnp.pad(b, ((0, 0), (0, pad_out - fan_out)))
        return w.astype(jnp.bfloat16), b.astype(jnp.bfloat16)

    w1, b1 = lin(ks[0], ks[1], IN_DIM, HID, HID)
    w2, b2 = lin(ks[2], ks[3], HID, HID, HID)
    w3, b3 = lin(ks[4], ks[5], HID, OUT_DIM, OUT_PAD)
    return (w1, b1, w2, b2, w3, b3)


@jax.jit
def neural_network_forward(x, params):
    # x: (B, 1, 28, 28) NCHW -> flatten to (B, 784) f32 (a free reshape).
    B = x.shape[0]
    w1, b1, w2, b2, w3, b3 = params

    TM = _pick_tm(B)
    Bp = _round_up(max(B, 8), TM)
    grid = (Bp // TM,)

    x2 = x.reshape(B, IN_DIM).astype(jnp.float32)
    if Bp != B:  # only materialize a padded copy when the tail needs it
        x2 = jnp.pad(x2, ((0, Bp - B), (0, 0)))

    bytes_accessed = (
        sum(int(a.size) * a.dtype.itemsize for a in (w1, b1, w2, b2, w3, b3))
        + Bp * IN_DIM * 4          # x streamed as f32
        + Bp * OUT_PAD * 2         # logits written back as bf16
    )
    cost = pl.CostEstimate(
        flops=2 * Bp * (IN_DIM * HID + HID * HID + HID * OUT_PAD),
        transcendentals=0,
        bytes_accessed=bytes_accessed,
    )

    out = pl.pallas_call(
        mlp_kernel,
        out_shape=jax.ShapeDtypeStruct((Bp, OUT_PAD), jnp.bfloat16),
        grid=grid,
        in_specs=[
            pl.BlockSpec((TM, IN_DIM), lambda i: (i, 0)),      # x: streamed (784 = full dim)
            pl.BlockSpec((IN_DIM, HID), lambda i: (0, 0)),     # w1: VMEM-resident
            pl.BlockSpec((1, HID), lambda i: (0, 0)),          # b1
            pl.BlockSpec((HID, HID), lambda i: (0, 0)),        # w2
            pl.BlockSpec((1, HID), lambda i: (0, 0)),          # b2
            pl.BlockSpec((HID, OUT_PAD), lambda i: (0, 0)),    # w3
            pl.BlockSpec((1, OUT_PAD), lambda i: (0, 0)),      # b3
        ],
        out_specs=pl.BlockSpec((TM, OUT_PAD), lambda i: (i, 0)),
        compiler_params=pltpu.CompilerParams(
            dimension_semantics=("parallel",),
        ),
        cost_estimate=cost,
    )(x2, w1, b1, w2, b2, w3, b3)

    # Slice away batch/lane padding; present f32 logits like the torch module.
    return out[:B, :OUT_DIM].astype(jnp.float32)


def reference_forward(x, params):
    # Pure-JAX reference using the same bf16 params and quantization chain.
    B = x.shape[0]
    w1, b1, w2, b2, w3, b3 = (p.astype(jnp.float32) for p in params)
    x2 = x.reshape(B, IN_DIM).astype(jnp.bfloat16).astype(jnp.float32)
    h1 = jnp.maximum(x2 @ w1 + b1, 0.0).astype(jnp.bfloat16).astype(jnp.float32)
    h2 = jnp.maximum(h1 @ w2 + b2, 0.0).astype(jnp.bfloat16).astype(jnp.float32)
    logits = (h2 @ w3 + b3).astype(jnp.bfloat16).astype(jnp.float32)
    return logits[:, :OUT_DIM]


if __name__ == "__main__":
    key = jax.random.PRNGKey(0)
    k_x, k_p = jax.random.split(key)

    B = 2
    x = jax.random.normal(k_x, (B, 1, 28, 28), jnp.float32)  # NCHW, like MNIST
    params = init_params(k_p)

    logits = neural_network_forward(x, params)
    jax.block_until_ready(logits)

    ref = reference_forward(x, params)
    assert logits.shape == (B, OUT_DIM), logits.shape
    assert jnp.allclose(logits, ref, atol=2e-2, rtol=2e-2), "mismatch vs reference"

    print("KERNEL_OK")
</pallas_src>

<mosaic_0001>
module attributes {stable_mosaic.version = 11 : i64} {
  func.func @mlp_kernel(%arg0: i32, %arg1: memref<8x784xf32, #tpu.memory_space<vmem>>, %arg2: memref<784x512xbf16, #tpu.memory_space<vmem>>, %arg3: memref<1x512xbf16, #tpu.memory_space<vmem>>, %arg4: memref<512x512xbf16, #tpu.memory_space<vmem>>, %arg5: memref<1x512xbf16, #tpu.memory_space<vmem>>, %arg6: memref<512x128xbf16, #tpu.memory_space<vmem>>, %arg7: memref<1x128xbf16, #tpu.memory_space<vmem>>, %arg8: memref<8x128xbf16, #tpu.memory_space<vmem>>) attributes {dimension_semantics = [#tpu.dimension_semantics<parallel>], iteration_bounds = array<i64: 1>, scalar_prefetch = 0 : i64, scratch_operands = 0 : i64, tpu.core_type = #tpu.core_type<tc>, window_params = [{transform_indices = @transform_0, window_bounds = array<i64: 8, 784>}, {pipeline_mode = #tpu.pipeline_mode<synchronous>, transform_indices = @transform_1, window_bounds = array<i64: 784, 512>}, {pipeline_mode = #tpu.pipeline_mode<synchronous>, transform_indices = @transform_2, window_bounds = array<i64: 1, 512>}, {pipeline_mode = #tpu.pipeline_mode<synchronous>, transform_indices = @transform_3, window_bounds = array<i64: 512, 512>}, {pipeline_mode = #tpu.pipeline_mode<synchronous>, transform_indices = @transform_4, window_bounds = array<i64: 1, 512>}, {pipeline_mode = #tpu.pipeline_mode<synchronous>, transform_indices = @transform_5, window_bounds = array<i64: 512, 128>}, {pipeline_mode = #tpu.pipeline_mode<synchronous>, transform_indices = @transform_6, window_bounds = array<i64: 1, 128>}, {transform_indices = @transform_7, window_bounds = array<i64: 8, 128>}]} {
    %c0 = arith.constant 0 : index
    %c0_0 = arith.constant 0 : index
    %0 = vector.load %arg1[%c0, %c0_0] : memref<8x784xf32, #tpu.memory_space<vmem>>, vector<8x784xf32>
    %1 = arith.truncf %0 : vector<8x784xf32> to vector<8x784xbf16>
    %c0_1 = arith.constant 0 : index
    %c0_2 = arith.constant 0 : index
    %2 = vector.load %arg2[%c0_1, %c0_2] : memref<784x512xbf16, #tpu.memory_space<vmem>>, vector<784x512xbf16>
    %cst = arith.constant dense<0.000000e+00> : vector<8x512xf32>
    %3 = tpu.matmul %1, %2, %cst {dimension_numbers = #tpu.dot_dimension_numbers<[1], [0], [0], [1], [0, 0, 1, 1], [], []>} : vector<8x784xbf16>, vector<784x512xbf16>, vector<8x512xf32> -> vector<8x512xf32>
    %c0_3 = arith.constant 0 : index
    %c0_4 = arith.constant 0 : index
    %4 = vector.load %arg3[%c0_3, %c0_4] : memref<1x512xbf16, #tpu.memory_space<vmem>>, vector<1x512xbf16>
    %5 = arith.extf %4 : vector<1x512xbf16> to vector<1x512xf32>
    %6 = vector.broadcast %5 : vector<1x512xf32> to vector<8x512xf32>
    %7 = arith.addf %3, %6 : vector<8x512xf32>
    %cst_5 = arith.constant 0.000000e+00 : f32
    %8 = vector.broadcast %cst_5 : f32 to vector<8x512xf32>
    %9 = arith.maximumf %7, %8 : vector<8x512xf32>
    %10 = arith.truncf %9 : vector<8x512xf32> to vector<8x512xbf16>
    %c0_6 = arith.constant 0 : index
    %c0_7 = arith.constant 0 : index
    %11 = vector.load %arg4[%c0_6, %c0_7] : memref<512x512xbf16, #tpu.memory_space<vmem>>, vector<512x512xbf16>
    %cst_8 = arith.constant dense<0.000000e+00> : vector<8x512xf32>
    %12 = tpu.matmul %10, %11, %cst_8 {dimension_numbers = #tpu.dot_dimension_numbers<[1], [0], [0], [1], [0, 0, 1, 1], [], []>} : vector<8x512xbf16>, vector<512x512xbf16>, vector<8x512xf32> -> vector<8x512xf32>
    %c0_9 = arith.constant 0 : index
    %c0_10 = arith.constant 0 : index
    %13 = vector.load %arg5[%c0_9, %c0_10] : memref<1x512xbf16, #tpu.memory_space<vmem>>, vector<1x512xbf16>
    %14 = arith.extf %13 : vector<1x512xbf16> to vector<1x512xf32>
    %15 = vector.broadcast %14 : vector<1x512xf32> to vector<8x512xf32>
    %16 = arith.addf %12, %15 : vector<8x512xf32>
    %cst_11 = arith.constant 0.000000e+00 : f32
    %17 = vector.broadcast %cst_11 : f32 to vector<8x512xf32>
    %18 = arith.maximumf %16, %17 : vector<8x512xf32>
    %19 = arith.truncf %18 : vector<8x512xf32> to vector<8x512xbf16>
    %c0_12 = arith.constant 0 : index
    %c0_13 = arith.constant 0 : index
    %20 = vector.load %arg6[%c0_12, %c0_13] : memref<512x128xbf16, #tpu.memory_space<vmem>>, vector<512x128xbf16>
    %cst_14 = arith.constant dense<0.000000e+00> : vector<8x128xf32>
    %21 = tpu.matmul %19, %20, %cst_14 {dimension_numbers = #tpu.dot_dimension_numbers<[1], [0], [0], [1], [0, 0, 1, 1], [], []>} : vector<8x512xbf16>, vector<512x128xbf16>, vector<8x128xf32> -> vector<8x128xf32>
    %c0_15 = arith.constant 0 : index
    %c0_16 = arith.constant 0 : index
    %22 = vector.load %arg7[%c0_15, %c0_16] : memref<1x128xbf16, #tpu.memory_space<vmem>>, vector<1x128xbf16>
    %23 = arith.extf %22 : vector<1x128xbf16> to vector<1x128xf32>
    %24 = vector.broadcast %23 : vector<1x128xf32> to vector<8x128xf32>
    %25 = arith.addf %21, %24 : vector<8x128xf32>
    %26 = arith.truncf %25 : vector<8x128xf32> to vector<8x128xbf16>
    %c0_17 = arith.constant 0 : index
    %c0_18 = arith.constant 0 : index
    %27 = vector.load %arg8[%c0_17, %c0_18] : memref<8x128xbf16, #tpu.memory_space<vmem>>, vector<8x128xbf16>
    tpu.vector_store %arg8[%c0_17, %c0_18], %26 {strides = array<i32>} : memref<8x128xbf16, #tpu.memory_space<vmem>>, vector<8x128xbf16>,
    return
  }
  func.func @transform_0(%arg0: i32) -> (i32, i32) {
    %c0_i32 = arith.constant 0 : i32
    %c0_i32_0 = arith.constant 0 : i32
    return %arg0, %c0_i32 : i32, i32
  }
  func.func @transform_1(%arg0: i32) -> (i32, i32) {
    %c0_i32 = arith.constant 0 : i32
    %c0_i32_0 = arith.constant 0 : i32
    %c0_i32_1 = arith.constant 0 : i32
    return %c0_i32, %c0_i32_0 : i32, i32
  }
  func.func @transform_2(%arg0: i32) -> (i32, i32) {
    %c0_i32 = arith.constant 0 : i32
    %c0_i32_0 = arith.constant 0 : i32
    %c0_i32_1 = arith.constant 0 : i32
    return %c0_i32, %c0_i32_0 : i32, i32
  }
  func.func @transform_3(%arg0: i32) -> (i32, i32) {
    %c0_i32 = arith.constant 0 : i32
    %c0_i32_0 = arith.constant 0 : i32
    %c0_i32_1 = arith.constant 0 : i32
    return %c0_i32, %c0_i32_0 : i32, i32
  }
  func.func @transform_4(%arg0: i32) -> (i32, i32) {
    %c0_i32 = arith.constant 0 : i32
    %c0_i32_0 = arith.constant 0 : i32
    %c0_i32_1 = arith.constant 0 : i32
    return %c0_i32, %c0_i32_0 : i32, i32
  }
  func.func @transform_5(%arg0: i32) -> (i32, i32) {
    %c0_i32 = arith.constant 0 : i32
    %c0_i32_0 = arith.constant 0 : i32
    %c0_i32_1 = arith.constant 0 : i32
    return %c0_i32, %c0_i32_0 : i32, i32
  }
  func.func @transform_6(%arg0: i32) -> (i32, i32) {
    %c0_i32 = arith.constant 0 : i32
    %c0_i32_0 = arith.constant 0 : i32
    %c0_i32_1 = arith.constant 0 : i32
    return %c0_i32, %c0_i32_0 : i32, i32
  }
  func.func @transform_7(%arg0: i32) -> (i32, i32) {
    %c0_i32 = arith.constant 0 : i32
    %c0_i32_0 = arith.constant 0 : i32
    return %arg0, %c0_i32 : i32, i32
  }
}

</mosaic_0001>

<llo_original>
// kernel: neural_network_forward.1
$region0: #{neural_network_forward.1}
  #allocation0 [shape = 'u32[]', space=smem, size = 0x4, offset = 0x4, fixed_abs, tag = 'smem constant byte address 0x4 - core index']
  #allocation1 [shape = 'u32[72,128]{1,0:T(1,128)}', space=vmem, size = 0x9000, scoped, tag = 'internal scratch']
  %s0 = inlined_call_operand.vmem [shape: f32[8,784], index: 0, kind: input, shape index: {}]
  %s1 = inlined_call_operand.hbm [shape: bf16[784,512], index: 1, kind: input, shape index: {}]
  %s2 = inlined_call_operand.vmem [shape: bf16[1,512], index: 2, kind: input, shape index: {}]
  %s3 = inlined_call_operand.hbm [shape: bf16[512,512], index: 3, kind: input, shape index: {}]
  %s4 = inlined_call_operand.vmem [shape: bf16[1,512], index: 4, kind: input, shape index: {}]
  %s5 = inlined_call_operand.vmem [shape: bf16[512,128], index: 5, kind: input, shape index: {}]
  %s6 = inlined_call_operand.vmem [shape: bf16[1,128], index: 6, kind: input, shape index: {}]
  %s7 = inlined_call_operand.vmem [shape: bf16[8,128], index: 7, kind: output, shape index: {}]
  %s8 = sld [smem:[#allocation0]]
  $region46: #{neural_network_forward.1} parent=0
    _
  %s10 = ssub.s32 1, %s8
  %s11 = scalar_select 0, %s10, %s8
  $region1: #{neural_network_forward.1} parent=0
    #allocation2 [shape = 'u8[802816]{0}', space=vmem, size = 0xc4000, scoped, tag = 'input window, operand 1, single buffered']
    #allocation3 [shape = 's32[1]{0}', space=sflag, size = 0x4, scoped, tag = 'scoped memory for neural_network_forward.1']
    #allocation4 [shape = 'u8[524288]{0}', space=vmem, size = 0x80000, scoped, tag = 'input window, operand 3, single buffered']
    #allocation5 [shape = 's32[1]{0}', space=sflag, size = 0x4, scoped, tag = 'scoped memory for neural_network_forward.1']
    %12 = vsyncpa [#allocation3], 0
    %13 = vsyncpa [#allocation5], 0
    // Predicated region
    $region2: #{neural_network_forward.1} parent=1 // pred_check
      _
    $region3: #{neural_network_forward.1} parent=1 // pred_check_branch
      %15 = sbr.rel (0) target = $region5
    $region4: #{neural_network_forward.1} parent=1 // pred_region
      _
    $region5: #{neural_network_forward.1} parent=1 // pred_fallthru
      _
    // Predicated region
    $region6: #{neural_network_forward.1} parent=1 // pred_check
      _
    $region7: #{neural_network_forward.1} parent=1 // pred_check_branch
      %17 = sbr.rel (0) target = $region9
    $region8: #{neural_network_forward.1} parent=1 // pred_region
      %19 = vsyncadd [#allocation3], 0
      %s20 = sshll.u32 %s1, 4
      %s21 = int_to_ptr.hbm [resolvable:$true] %s20
      %s22 = sshll.u32 [#allocation2], 4
      %s23 = int_to_ptr.vmem [resolvable:$true] %s22
      %28 = dma.hbm_to_vmem [thread:$0]  %s21, 25088, %s23, [#allocation3], 256, 256, 16
    $region9: #{neural_network_forward.1} parent=1 // pred_fallthru
      _
    // Predicated region
    $region10: #{neural_network_forward.1} parent=1 // pred_check
      _
    $region11: #{neural_network_forward.1} parent=1 // pred_check_branch
      %30 = sbr.rel (0) target = $region13
    $region12: #{neural_network_forward.1} parent=1 // pred_region
      _
    $region13: #{neural_network_forward.1} parent=1 // pred_fallthru
      _
    // Predicated region
    $region14: #{neural_network_forward.1} parent=1 // pred_check
      _
    $region15: #{neural_network_forward.1} parent=1 // pred_check_branch
      %32 = sbr.rel (0) target = $region17
    $region16: #{neural_network_forward.1} parent=1 // pred_region
      %34 = vsyncadd [#allocation5], 0
      %s35 = sshll.u32 %s3, 4
      %s36 = int_to_ptr.hbm [resolvable:$true] %s35
      %s37 = sshll.u32 [#allocation4], 4
      %s38 = int_to_ptr.vmem [resolvable:$true] %s37
      %43 = dma.hbm_to_vmem [thread:$0]  %s36, 16384, %s38, [#allocation5], 256, 256, 16
    $region17: #{neural_network_forward.1} parent=1 // pred_fallthru
      _
    // Predicated region
    $region18: #{neural_network_forward.1} parent=1 // pred_check
      _
    $region19: #{neural_network_forward.1} parent=1 // pred_check_branch
      %45 = sbr.rel (0) target = $region21
    $region20: #{neural_network_forward.1} parent=1 // pred_region
      _
    $region21: #{neural_network_forward.1} parent=1 // pred_fallthru
      _
    // Predicated region
    $region22: #{neural_network_forward.1} parent=1 // pred_check
      _
    $region23: #{neural_network_forward.1} parent=1 // pred_check_branch
      %47 = sbr.rel (0) target = $region25
    $region24: #{neural_network_forward.1} parent=1 // pred_region
      _
    $region25: #{neural_network_forward.1} parent=1 // pred_fallthru
      _
    // Predicated region
    $region26: #{neural_network_forward.1} parent=1 // pred_check
      _
    $region27: #{neural_network_forward.1} parent=1 // pred_check_branch
      %49 = sbr.rel (0) target = $region29
    $region28: #{neural_network_forward.1} parent=1 // pred_region
      _
    $region29: #{neural_network_forward.1} parent=1 // pred_fallthru
      _
    // Predicated region
    $region30: #{neural_network_forward.1} parent=1 // pred_check
      _
    $region31: #{neural_network_forward.1} parent=1 // pred_check_branch
      %51 = sbr.rel (0) target = $region33
    $region32: #{neural_network_forward.1} parent=1 // pred_region
      %53 = dma.done [#allocation3], 25088
    $region33: #{neural_network_forward.1} parent=1 // pred_fallthru
      _
    // Predicated region
    $region34: #{neural_network_forward.1} parent=1 // pred_check
      _
    $region35: #{neural_network_forward.1} parent=1 // pred_check_branch
      %55 = sbr.rel (0) target = $region37
    $region36: #{neural_network_forward.1} parent=1 // pred_region
      %57 = dma.done [#allocation5], 16384
    $region37: #{neural_network_forward.1} parent=1 // pred_fallthru
      _
    %v59 = vld [vmem:[%s0] sm:$0xff]
    %v60 = vld [vmem:[%s0 + $0x8] sm:$0xff]
    %v61 = vld [vmem:[%s0 + $0x10] sm:$0xff]
    %v62 = vld [vmem:[%s0 + $0x18] sm:$0xff]
    %v63 = vld [vmem:[%s0 + $0x20] sm:$0xff]
    %v64 = vld [vmem:[%s0 + $0x28] sm:$0xff]
    %v65 = vld [vmem:[%s0 + $0x30] sm:$0xff]
    %v66 = vpack.c.bf16 %v59, %v59
    %v67 = vpack.c.bf16 %v60, %v60
    %v68 = vpack.c.bf16 %v61, %v61
    %v69 = vpack.c.bf16 %v62, %v62
    %v70 = vpack.c.bf16 %v63, %v63
    %v71 = vpack.c.bf16 %v64, %v64
    %v72 = vpack.c.bf16 %v65, %v65
    %v73 = vld [vmem:[#allocation2] sm:$0xff]
    %v74 = vld [vmem:[#allocation2 + $0x8] sm:$0xff]
    %v75 = vld [vmem:[#allocation2 + $0x10] sm:$0xff]
    %v76 = vld [vmem:[#allocation2 + $0x18] sm:$0xff]
    %v77 = vld [vmem:[#allocation2 + $0x20] sm:$0xff]
    %v78 = vld [vmem:[#allocation2 + $0x28] sm:$0xff]
    %v79 = vld [vmem:[#allocation2 + $0x30] sm:$0xff]
    %v80 = vld [vmem:[#allocation2 + $0x38] sm:$0xff]
    %v81 = vld [vmem:[#allocation2 + $0x40] sm:$0xff]
    %v82 = vld [vmem:[#allocation2 + $0x48] sm:$0xff]
    %v83 = vld [vmem:[#allocation2 + $0x50] sm:$0xff]
    %v84 = vld [vmem:[#allocation2 + $0x58] sm:$0xff]
    %v85 = vld [vmem:[#allocation2 + $0x60] sm:$0xff]
    %v86 = vld [vmem:[#allocation2 + $0x68] sm:$0xff]
    %v87 = vld [vmem:[#allocation2 + $0x70] sm:$0xff]
    %v88 = vld [vmem:[#allocation2 + $0x78] sm:$0xff]
    %v89 = vld [vmem:[#allocation2 + $0x80] sm:$0xff]
    %v90 = vld [vmem:[#allocation2 + $0x88] sm:$0xff]
    %v91 = vld [vmem:[#allocation2 + $0x90] sm:$0xff]
    %v92 = vld [vmem:[#allocation2 + $0x98] sm:$0xff]
    %v93 = vld [vmem:[#allocation2 + $0xa0] sm:$0xff]
    %v94 = vld [vmem:[#allocation2 + $0xa8] sm:$0xff]
    %v95 = vld [vmem:[#allocation2 + $0xb0] sm:$0xff]
    %v96 = vld [vmem:[#allocation2 + $0xb8] sm:$0xff]
    %v97 = vld [vmem:[#allocation2 + $0xc0] sm:$0xff]
    %v98 = vld [vmem:[#allocation2 + $0xc8] sm:$0xff]
    %v99 = vld [vmem:[#allocation2 + $0xd0] sm:$0xff]
    %v100 = vld [vmem:[#allocation2 + $0xd8] sm:$0xff]
    %v101 = vld [vmem:[#allocation2 + $0xe0] sm:$0xff]
    %v102 = vld [vmem:[#allocation2 + $0xe8] sm:$0xff]
    %v103 = vld [vmem:[#allocation2 + $0xf0] sm:$0xff]
    %v104 = vld [vmem:[#allocation2 + $0xf8] sm:$0xff]
    %v105 = vld [vmem:[#allocation2 + $0x100] sm:$0xff]
    %v106 = vld [vmem:[#allocation2 + $0x108] sm:$0xff]
    %v107 = vld [vmem:[#allocation2 + $0x110] sm:$0xff]
    %v108 = vld [vmem:[#allocation2 + $0x118] sm:$0xff]
    %v109 = vld [vmem:[#allocation2 + $0x120] sm:$0xff]
    %v110 = vld [vmem:[#allocation2 + $0x128] sm:$0xff]
    %v111 = vld [vmem:[#allocation2 + $0x130] sm:$0xff]
    %v112 = vld [vmem:[#allocation2 + $0x138] sm:$0xff]
    %v113 = vld [vmem:[#allocation2 + $0x140] sm:$0xff]
    %v114 = vld [vmem:[#allocation2 + $0x148] sm:$0xff]
    %v115 = vld [vmem:[#allocation2 + $0x150] sm:$0xff]
    %v116 = vld [vmem:[#allocation2 + $0x158] sm:$0xff]
    %v117 = vld [vmem:[#allocation2 + $0x160] sm:$0xff]
    %v118 = vld [vmem:[#allocation2 + $0x168] sm:$0xff]
    %v119 = vld [vmem:[#allocation2 + $0x170] sm:$0xff]
    %v120 = vld [vmem:[#allocation2 + $0x178] sm:$0xff]
    %v121 = vld [vmem:[#allocation2 + $0x180] sm:$0xff]
    %v122 = vld [vmem:[#allocation2 + $0x188] sm:$0xff]
    %v123 = vld [vmem:[#allocation2 + $0x190] sm:$0xff]
    %v124 = vld [vmem:[#allocation2 + $0x198] sm:$0xff]
    %v125 = vld [vmem:[#allocation2 + $0x1a0] sm:$0xff]
    %v126 = vld [vmem:[#allocation2 + $0x1a8] sm:$0xff]
    %v127 = vld [vmem:[#allocation2 + $0x1b0] sm:$0xff]
    %v128 = vld [vmem:[#allocation2 + $0x1b8] sm:$0xff]
    %v129 = vld [vmem:[#allocation2 + $0x1c0] sm:$0xff]
    %v130 = vld [vmem:[#allocation2 + $0x1c8] sm:$0xff]
    %v131 = vld [vmem:[#allocation2 + $0x1d0] sm:$0xff]
    %v132 = vld [vmem:[#allocation2 + $0x1d8] sm:$0xff]
    %v133 = vld [vmem:[#allocation2 + $0x1e0] sm:$0xff]
    %v134 = vld [vmem:[#allocation2 + $0x1e8] sm:$0xff]
    %v135 = vld [vmem:[#allocation2 + $0x1f0] sm:$0xff]
    %v136 = vld [vmem:[#allocation2 + $0x1f8] sm:$0xff]
    %v137 = vld [vmem:[#allocation2 + $0x200] sm:$0xff]
    %v138 = vld [vmem:[#allocation2 + $0x208] sm:$0xff]
    %v139 = vld [vmem:[#allocation2 + $0x210] sm:$0xff]
    %v140 = vld [vmem:[#allocation2 + $0x218] sm:$0xff]
    %v141 = vld [vmem:[#allocation2 + $0x220] sm:$0xff]
    %v142 = vld [vmem:[#allocation2 + $0x228] sm:$0xff]
    %v143 = vld [vmem:[#allocation2 + $0x230] sm:$0xff]
    %v144 = vld [vmem:[#allocation2 + $0x238] sm:$0xff]
    %v145 = vld [vmem:[#allocation2 + $0x240] sm:$0xff]
    %v146 = vld [vmem:[#allocation2 + $0x248] sm:$0xff]
    %v147 = vld [vmem:[#allocation2 + $0x250] sm:$0xff]
    %v148 = vld [vmem:[#allocation2 + $0x258] sm:$0xff]
    %v149 = vld [vmem:[#allocation2 + $0x260] sm:$0xff]
    %v150 = vld [vmem:[#allocation2 + $0x268] sm:$0xff]
    %v151 = vld [vmem:[#allocation2 + $0x270] sm:$0xff]
    %v152 = vld [vmem:[#allocation2 + $0x278] sm:$0xff]
    %v153 = vld [vmem:[#allocation2 + $0x280] sm:$0xff]
    %v154 = vld [vmem:[#allocation2 + $0x288] sm:$0xff]
    %v155 = vld [vmem:[#allocation2 + $0x290] sm:$0xff]
    %v156 = vld [vmem:[#allocation2 + $0x298] sm:$0xff]
    %v157 = vld [vmem:[#allocation2 + $0x2a0] sm:$0xff]
    %v158 = vld [vmem:[#allocation2 + $0x2a8] sm:$0xff]
    %v159 = vld [vmem:[#allocation2 + $0x2b0] sm:$0xff]
    %v160 = vld [vmem:[#allocation2 + $0x2b8] sm:$0xff]
    %v161 = vld [vmem:[#allocation2 + $0x2c0] sm:$0xff]
    %v162 = vld [vmem:[#allocation2 + $0x2c8] sm:$0xff]
    %v163 = vld [vmem:[#allocation2 + $0x2d0] sm:$0xff]
    %v164 = vld [vmem:[#allocation2 + $0x2d8] sm:$0xff]
    %v165 = vld [vmem:[#allocation2 + $0x2e0] sm:$0xff]
    %v166 = vld [vmem:[#allocation2 + $0x2e8] sm:$0xff]
    %v167 = vld [vmem:[#allocation2 + $0x2f0] sm:$0xff]
    %v168 = vld [vmem:[#allocation2 + $0x2f8] sm:$0xff]
    %v169 = vld [vmem:[#allocation2 + $0x300] sm:$0xff]
    %v170 = vld [vmem:[#allocation2 + $0x308] sm:$0xff]
    %v171 = vld [vmem:[#allocation2 + $0x310] sm:$0xff]
    %v172 = vld [vmem:[#allocation2 + $0x318] sm:$0xff]
    %v173 = vld [vmem:[#allocation2 + $0x320] sm:$0xff]
    %v174 = vld [vmem:[#allocation2 + $0x328] sm:$0xff]
    %v175 = vld [vmem:[#allocation2 + $0x330] sm:$0xff]
    %v176 = vld [vmem:[#allocation2 + $0x338] sm:$0xff]
    %v177 = vld [vmem:[#allocation2 + $0x340] sm:$0xff]
    %v178 = vld [vmem:[#allocation2 + $0x348] sm:$0xff]
    %v179 = vld [vmem:[#allocation2 + $0x350] sm:$0xff]
    %v180 = vld [vmem:[#allocation2 + $0x358] sm:$0xff]
    %v181 = vld [vmem:[#allocation2 + $0x360] sm:$0xff]
    %v182 = vld [vmem:[#allocation2 + $0x368] sm:$0xff]
    %v183 = vld [vmem:[#allocation2 + $0x370] sm:$0xff]
    %v184 = vld [vmem:[#allocation2 + $0x378] sm:$0xff]
    %v185 = vld [vmem:[#allocation2 + $0x380] sm:$0xff]
    %v186 = vld [vmem:[#allocation2 + $0x388] sm:$0xff]
    %v187 = vld [vmem:[#allocation2 + $0x390] sm:$0xff]
    %v188 = vld [vmem:[#allocation2 + $0x398] sm:$0xff]
    %v189 = vld [vmem:[#allocation2 + $0x3a0] sm:$0xff]
    %v190 = vld [vmem:[#allocation2 + $0x3a8] sm:$0xff]
    %v191 = vld [vmem:[#allocation2 + $0x3b0] sm:$0xff]
    %v192 = vld [vmem:[#allocation2 + $0x3b8] sm:$0xff]
    %v193 = vld [vmem:[#allocation2 + $0x3c0] sm:$0xff]
    %v194 = vld [vmem:[#allocation2 + $0x3c8] sm:$0xff]
    %v195 = vld [vmem:[#allocation2 + $0x3d0] sm:$0xff]
    %v196 = vld [vmem:[#allocation2 + $0x3d8] sm:$0xff]
    %v197 = vld [vmem:[#allocation2 + $0x3e0] sm:$0xff]
    %v198 = vld [vmem:[#allocation2 + $0x3e8] sm:$0xff]
    %v199 = vld [vmem:[#allocation2 + $0x3f0] sm:$0xff]
    %v200 = vld [vmem:[#allocation2 + $0x3f8] sm:$0xff]
    %v201 = vld [vmem:[#allocation2 + $0x400] sm:$0xff]
    %v202 = vld [vmem:[#allocation2 + $0x408] sm:$0xff]
    %v203 = vld [vmem:[#allocation2 + $0x410] sm:$0xff]
    %v204 = vld [vmem:[#allocation2 + $0x418] sm:$0xff]
    %v205 = vld [vmem:[#allocation2 + $0x420] sm:$0xff]
    %v206 = vld [vmem:[#allocation2 + $0x428] sm:$0xff]
    %v207 = vld [vmem:[#allocation2 + $0x430] sm:$0xff]
    %v208 = vld [vmem:[#allocation2 + $0x438] sm:$0xff]
    %v209 = vld [vmem:[#allocation2 + $0x440] sm:$0xff]
    %v210 = vld [vmem:[#allocation2 + $0x448] sm:$0xff]
    %v211 = vld [vmem:[#allocation2 + $0x450] sm:$0xff]
    %v212 = vld [vmem:[#allocation2 + $0x458] sm:$0xff]
    %v213 = vld [vmem:[#allocation2 + $0x460] sm:$0xff]
    %v214 = vld [vmem:[#allocation2 + $0x468] sm:$0xff]
    %v215 = vld [vmem:[#allocation2 + $0x470] sm:$0xff]
    %v216 = vld [vmem:[#allocation2 + $0x478] sm:$0xff]
    %v217 = vld [vmem:[#allocation2 + $0x480] sm:$0xff]
    %v218 = vld [vmem:[#allocation2 + $0x488] sm:$0xff]
    %v219 = vld [vmem:[#allocation2 + $0x490] sm:$0xff]
    %v220 = vld [vmem:[#allocation2 + $0x498] sm:$0xff]
    %v221 = vld [vmem:[#allocation2 + $0x4a0] sm:$0xff]
    %v222 = vld [vmem:[#allocation2 + $0x4a8] sm:$0xff]
    %v223 = vld [vmem:[#allocation2 + $0x4b0] sm:$0xff]
    %v224 = vld [vmem:[#allocation2 + $0x4b8] sm:$0xff]
    %v225 = vld [vmem:[#allocation2 + $0x4c0] sm:$0xff]
    %v226 = vld [vmem:[#allocation2 + $0x4c8] sm:$0xff]
    %v227 = vld [vmem:[#allocation2 + $0x4d0] sm:$0xff]
    %v228 = vld [vmem:[#allocation2 + $0x4d8] sm:$0xff]
    %v229 = vld [vmem:[#allocation2 + $0x4e0] sm:$0xff]
    %v230 = vld [vmem:[#allocation2 + $0x4e8] sm:$0xff]
    %v231 = vld [vmem:[#allocation2 + $0x4f0] sm:$0xff]
    %v232 = vld [vmem:[#allocation2 + $0x4f8] sm:$0xff]
    %v233 = vld [vmem:[#allocation2 + $0x500] sm:$0xff]
    %v234 = vld [vmem:[#allocation2 + $0x508] sm:$0xff]
    %v235 = vld [vmem:[#allocation2 + $0x510] sm:$0xff]
    %v236 = vld [vmem:[#allocation2 + $0x518] sm:$0xff]
    %v237 = vld [vmem:[#allocation2 + $0x520] sm:$0xff]
    %v238 = vld [vmem:[#allocation2 + $0x528] sm:$0xff]
    %v239 = vld [vmem:[#allocation2 + $0x530] sm:$0xff]
    %v240 = vld [vmem:[#allocation2 + $0x538] sm:$0xff]
    %v241 = vld [vmem:[#allocation2 + $0x540] sm:$0xff]
    %v242 = vld [vmem:[#allocation2 + $0x548] sm:$0xff]
    %v243 = vld [vmem:[#allocation2 + $0x550] sm:$0xff]
    %v244 = vld [vmem:[#allocation2 + $0x558] sm:$0xff]
    %v245 = vld [vmem:[#allocation2 + $0x560] sm:$0xff]
    %v246 = vld [vmem:[#allocation2 + $0x568] sm:$0xff]
    %v247 = vld [vmem:[#allocation2 + $0x570] sm:$0xff]
    %v248 = vld [vmem:[#allocation2 + $0x578] sm:$0xff]
    %v249 = vld [vmem:[#allocation2 + $0x580] sm:$0xff]
    %v250 = vld [vmem:[#allocation2 + $0x588] sm:$0xff]
    %v251 = vld [vmem:[#allocation2 + $0x590] sm:$0xff]
    %v252 = vld [vmem:[#allocation2 + $0x598] sm:$0xff]
    %v253 = vld [vmem:[#allocation2 + $0x5a0] sm:$0xff]
    %v254 = vld [vmem:[#allocation2 + $0x5a8] sm:$0xff]
    %v255 = vld [vmem:[#allocation2 + $0x5b0] sm:$0xff]
    %v256 = vld [vmem:[#allocation2 + $0x5b8] sm:$0xff]
    %v257 = vld [vmem:[#allocation2 + $0x5c0] sm:$0xff]
    %v258 = vld [vmem:[#allocation2 + $0x5c8] sm:$0xff]
    %v259 = vld [vmem:[#allocation2 + $0x5d0] sm:$0xff]
    %v260 = vld [vmem:[#allocation2 + $0x5d8] sm:$0xff]
    %v261 = vld [vmem:[#allocation2 + $0x5e0] sm:$0xff]
    %v262 = vld [vmem:[#allocation2 + $0x5e8] sm:$0xff]
    %v263 = vld [vmem:[#allocation2 + $0x5f0] sm:$0xff]
    %v264 = vld [vmem:[#allocation2 + $0x5f8] sm:$0xff]
    %v265 = vld [vmem:[#allocation2 + $0x600] sm:$0xff]
    %v266 = vld [vmem:[#allocation2 + $0x608] sm:$0xff]
    %v267 = vld [vmem:[#allocation2 + $0x610] sm:$0xff]
    %v268 = vld [vmem:[#allocation2 + $0x618] sm:$0xff]
    %v269 = vld [vmem:[%s2] sm:$0xf]
    %v270 = vunpack.c.l.bf16 %v269
    %v272 = vperm.slane %v270, 0
    %v273 = vperm.slane %v270, 2
    %v274 = vperm.slane %v270, 4
    %v275 = vperm.slane %v270, 6
    %v280 = vperm.slane %v272, 0
    %v281 = vperm.slane %v273, 0
    %v282 = vperm.slane %v274, 0
    %v283 = vperm.slane %v275, 0
    %v480 = vunpack.c.l.b16 %v73
    %v481 = vunpack.c.h.b16 %v73
    %v482 = vunpack.c.l.b16 %v74
    %v483 = vunpack.c.h.b16 %v74
    %v484 = vunpack.c.l.b16 %v75
    %v485 = vunpack.c.h.b16 %v75
    %v486 = vunpack.c.l.b16 %v76
    %v487 = vunpack.c.h.b16 %v76
    %v488 = vunpack.c.l.b16 %v77
    %v489 = vunpack.c.h.b16 %v77
    %v490 = vunpack.c.l.b16 %v78
    %v491 = vunpack.c.h.b16 %v78
    %v492 = vunpack.c.l.b16 %v79
    %v493 = vunpack.c.h.b16 %v79
    %v494 = vunpack.c.l.b16 %v80
    %v495 = vunpack.c.h.b16 %v80
    %v496 = vunpack.c.l.b16 %v81
    %v497 = vunpack.c.h.b16 %v81
    %v498 = vunpack.c.l.b16 %v82
    %v499 = vunpack.c.h.b16 %v82
    %v500 = vunpack.c.l.b16 %v83
    %v501 = vunpack.c.h.b16 %v83
    %v502 = vunpack.c.l.b16 %v84
    %v503 = vunpack.c.h.b16 %v84
    %v504 = vunpack.c.l.b16 %v85
    %v505 = vunpack.c.h.b16 %v85
    %v506 = vunpack.c.l.b16 %v86
    %v507 = vunpack.c.h.b16 %v86
    %v508 = vunpack.c.l.b16 %v87
    %v509 = vunpack.c.h.b16 %v87
    %v510 = vunpack.c.l.b16 %v88
    %v511 = vunpack.c.h.b16 %v88
    %v512 = vunpack.c.l.b16 %v89
    %v513 = vunpack.c.h.b16 %v89
    %v514 = vunpack.c.l.b16 %v90
    %v515 = vunpack.c.h.b16 %v90
    %v516 = vunpack.c.l.b16 %v91
    %v517 = vunpack.c.h.b16 %v91
    %v518 = vunpack.c.l.b16 %v92
    %v519 = vunpack.c.h.b16 %v92
    %v520 = vunpack.c.l.b16 %v93
    %v521 = vunpack.c.h.b16 %v93
    %v522 = vunpack.c.l.b16 %v94
    %v523 = vunpack.c.h.b16 %v94
    %v524 = vunpack.c.l.b16 %v95
    %v525 = vunpack.c.h.b16 %v95
    %v526 = vunpack.c.l.b16 %v96
    %v527 = vunpack.c.h.b16 %v96
    %v528 = vunpack.c.l.b16 %v97
    %v529 = vunpack.c.h.b16 %v97
    %v530 = vunpack.c.l.b16 %v98
    %v531 = vunpack.c.h.b16 %v98
    %v532 = vunpack.c.l.b16 %v99
    %v533 = vunpack.c.h.b16 %v99
    %v534 = vunpack.c.l.b16 %v100
    %v535 = vunpack.c.h.b16 %v100
    %v536 = vunpack.c.l.b16 %v101
    %v537 = vunpack.c.h.b16 %v101
    %v538 = vunpack.c.l.b16 %v102
    %v539 = vunpack.c.h.b16 %v102
    %v540 = vunpack.c.l.b16 %v103
    %v541 = vunpack.c.h.b16 %v103
    %v542 = vunpack.c.l.b16 %v104
    %v543 = vunpack.c.h.b16 %v104
    %v544 = vunpack.c.l.b16 %v105
    %v545 = vunpack.c.h.b16 %v105
    %v546 = vunpack.c.l.b16 %v106
    %v547 = vunpack.c.h.b16 %v106
    %v548 = vunpack.c.l.b16 %v107
    %v549 = vunpack.c.h.b16 %v107
    %v550 = vunpack.c.l.b16 %v108
    %v551 = vunpack.c.h.b16 %v108
    %v552 = vunpack.c.l.b16 %v109
    %v553 = vunpack.c.h.b16 %v109
    %v554 = vunpack.c.l.b16 %v110
    %v555 = vunpack.c.h.b16 %v110
    %v556 = vunpack.c.l.b16 %v111
    %v557 = vunpack.c.h.b16 %v111
    %v558 = vunpack.c.l.b16 %v112
    %v559 = vunpack.c.h.b16 %v112
    %v560 = vunpack.c.l.b16 %v113
    %v561 = vunpack.c.h.b16 %v113
    %v562 = vunpack.c.l.b16 %v114
    %v563 = vunpack.c.h.b16 %v114
    %v564 = vunpack.c.l.b16 %v115
    %v565 = vunpack.c.h.b16 %v115
    %v566 = vunpack.c.l.b16 %v116
    %v567 = vunpack.c.h.b16 %v116
    %v568 = vunpack.c.l.b16 %v117
    %v569 = vunpack.c.h.b16 %v117
    %v570 = vunpack.c.l.b16 %v118
    %v571 = vunpack.c.h.b16 %v118
    %v572 = vunpack.c.l.b16 %v119
    %v573 = vunpack.c.h.b16 %v119
    %v574 = vunpack.c.l.b16 %v120
    %v575 = vunpack.c.h.b16 %v120
    %v576 = vunpack.c.l.b16 %v121
    %v577 = vunpack.c.h.b16 %v121
    %v578 = vunpack.c.l.b16 %v122
    %v579 = vunpack.c.h.b16 %v122
    %v580 = vunpack.c.l.b16 %v123
    %v581 = vunpack.c.h.b16 %v123
    %v582 = vunpack.c.l.b16 %v124
    %v583 = vunpack.c.h.b16 %v124
    %v584 = vunpack.c.l.b16 %v125
    %v585 = vunpack.c.h.b16 %v125
    %v586 = vunpack.c.l.b16 %v126
    %v587 = vunpack.c.h.b16 %v126
    %v588 = vunpack.c.l.b16 %v127
    %v589 = vunpack.c.h.b16 %v127
    %v590 = vunpack.c.l.b16 %v128
    %v591 = vunpack.c.h.b16 %v128
    %v592 = vunpack.c.l.b16 %v129
    %v593 = vunpack.c.h.b16 %v129
    %v594 = vunpack.c.l.b16 %v130
    %v595 = vunpack.c.h.b16 %v130
    %v596 = vunpack.c.l.b16 %v131
    %v597 = vunpack.c.h.b16 %v131
    %v598 = vunpack.c.l.b16 %v132
    %v599 = vunpack.c.h.b16 %v132
    %v600 = vunpack.c.l.b16 %v133
    %v601 = vunpack.c.h.b16 %v133
    %v602 = vunpack.c.l.b16 %v134
    %v603 = vunpack.c.h.b16 %v134
    %v604 = vunpack.c.l.b16 %v135
    %v605 = vunpack.c.h.b16 %v135
    %v606 = vunpack.c.l.b16 %v136
    %v607 = vunpack.c.h.b16 %v136
    %v608 = vunpack.c.l.b16 %v137
    %v609 = vunpack.c.h.b16 %v137
    %v610 = vunpack.c.l.b16 %v138
    %v611 = vunpack.c.h.b16 %v138
    %v612 = vunpack.c.l.b16 %v139
    %v613 = vunpack.c.h.b16 %v139
    %v614 = vunpack.c.l.b16 %v140
    %v615 = vunpack.c.h.b16 %v140
    %v616 = vunpack.c.l.b16 %v141
    %v617 = vunpack.c.h.b16 %v141
    %v618 = vunpack.c.l.b16 %v142
    %v619 = vunpack.c.h.b16 %v142
    %v620 = vunpack.c.l.b16 %v143
    %v621 = vunpack.c.h.b16 %v143
    %v622 = vunpack.c.l.b16 %v144
    %v623 = vunpack.c.h.b16 %v144
    %v624 = vunpack.c.l.b16 %v145
    %v625 = vunpack.c.h.b16 %v145
    %v626 = vunpack.c.l.b16 %v146
    %v627 = vunpack.c.h.b16 %v146
    %v628 = vunpack.c.l.b16 %v147
    %v629 = vunpack.c.h.b16 %v147
    %v630 = vunpack.c.l.b16 %v148
    %v631 = vunpack.c.h.b16 %v148
    %v632 = vunpack.c.l.b16 %v149
    %v633 = vunpack.c.h.b16 %v149
    %v634 = vunpack.c.l.b16 %v150
    %v635 = vunpack.c.h.b16 %v150
    %v636 = vunpack.c.l.b16 %v151
    %v637 = vunpack.c.h.b16 %v151
    %v638 = vunpack.c.l.b16 %v152
    %v639 = vunpack.c.h.b16 %v152
    %v640 = vunpack.c.l.b16 %v153
    %v641 = vunpack.c.h.b16 %v153
    %v642 = vunpack.c.l.b16 %v154
    %v643 = vunpack.c.h.b16 %v154
    %v644 = vunpack.c.l.b16 %v155
    %v645 = vunpack.c.h.b16 %v155
    %v646 = vunpack.c.l.b16 %v156
    %v647 = vunpack.c.h.b16 %v156
    %v648 = vunpack.c.l.b16 %v157
    %v649 = vunpack.c.h.b16 %v157
    %v650 = vunpack.c.l.b16 %v158
    %v651 = vunpack.c.h.b16 %v158
    %v652 = vunpack.c.l.b16 %v159
    %v653 = vunpack.c.h.b16 %v159
    %v654 = vunpack.c.l.b16 %v160
    %v655 = vunpack.c.h.b16 %v160
    %v656 = vunpack.c.l.b16 %v161
    %v657 = vunpack.c.h.b16 %v161
    %v658 = vunpack.c.l.b16 %v162
    %v659 = vunpack.c.h.b16 %v162
    %v660 = vunpack.c.l.b16 %v163
    %v661 = vunpack.c.h.b16 %v163
    %v662 = vunpack.c.l.b16 %v164
    %v663 = vunpack.c.h.b16 %v164
    %v664 = vunpack.c.l.b16 %v165
    %v665 = vunpack.c.h.b16 %v165
    %v666 = vunpack.c.l.b16 %v166
    %v667 = vunpack.c.h.b16 %v166
    %v668 = vunpack.c.l.b16 %v167
    %v669 = vunpack.c.h.b16 %v167
    %v670 = vunpack.c.l.b16 %v168
    %v671 = vunpack.c.h.b16 %v168
    %v672 = vunpack.c.l.b16 %v169
    %v673 = vunpack.c.h.b16 %v169
    %v674 = vunpack.c.l.b16 %v170
    %v675 = vunpack.c.h.b16 %v170
    %v676 = vunpack.c.l.b16 %v171
    %v677 = vunpack.c.h.b16 %v171
    %v678 = vunpack.c.l.b16 %v172
    %v679 = vunpack.c.h.b16 %v172
    %v680 = vunpack.c.l.b16 %v173
    %v681 = vunpack.c.h.b16 %v173
    %v682 = vunpack.c.l.b16 %v174
    %v683 = vunpack.c.h.b16 %v174
    %v684 = vunpack.c.l.b16 %v175
    %v685 = vunpack.c.h.b16 %v175
    %v686 = vunpack.c.l.b16 %v176
    %v687 = vunpack.c.h.b16 %v176
    %v688 = vunpack.c.l.b16 %v177
    %v689 = vunpack.c.h.b16 %v177
    %v690 = vunpack.c.l.b16 %v178
    %v691 = vunpack.c.h.b16 %v178
    %v692 = vunpack.c.l.b16 %v179
    %v693 = vunpack.c.h.b16 %v179
    %v694 = vunpack.c.l.b16 %v180
    %v695 = vunpack.c.h.b16 %v180
    %v696 = vunpack.c.l.b16 %v181
    %v697 = vunpack.c.h.b16 %v181
    %v698 = vunpack.c.l.b16 %v182
    %v699 = vunpack.c.h.b16 %v182
    %v700 = vunpack.c.l.b16 %v183
    %v701 = vunpack.c.h.b16 %v183
    %v702 = vunpack.c.l.b16 %v184
    %v703 = vunpack.c.h.b16 %v184
    %v704 = vunpack.c.l.b16 %v185
    %v705 = vunpack.c.h.b16 %v185
    %v706 = vunpack.c.l.b16 %v186
    %v707 = vunpack.c.h.b16 %v186
    %v708 = vunpack.c.l.b16 %v187
    %v709 = vunpack.c.h.b16 %v187
    %v710 = vunpack.c.l.b16 %v188
    %v711 = vunpack.c.h.b16 %v188
    %v712 = vunpack.c.l.b16 %v189
    %v713 = vunpack.c.h.b16 %v189
    %v714 = vunpack.c.l.b16 %v190
    %v715 = vunpack.c.h.b16 %v190
    %v716 = vunpack.c.l.b16 %v191
    %v717 = vunpack.c.h.b16 %v191
    %v718 = vunpack.c.l.b16 %v192
    %v719 = vunpack.c.h.b16 %v192
    %v720 = vunpack.c.l.b16 %v193
    %v721 = vunpack.c.h.b16 %v193
    %v722 = vunpack.c.l.b16 %v194
    %v723 = vunpack.c.h.b16 %v194
    %v724 = vunpack.c.l.b16 %v195
    %v725 = vunpack.c.h.b16 %v195
    %v726 = vunpack.c.l.b16 %v196
    %v727 = vunpack.c.h.b16 %v196
    %v728 = vunpack.c.l.b16 %v197
    %v729 = vunpack.c.h.b16 %v197
    %v730 = vunpack.c.l.b16 %v198
    %v731 = vunpack.c.h.b16 %v198
    %v732 = vunpack.c.l.b16 %v199
    %v733 = vunpack.c.h.b16 %v199
    %v734 = vunpack.c.l.b16 %v200
    %v735 = vunpack.c.h.b16 %v200
    %v736 = vunpack.c.l.b16 %v201
    %v737 = vunpack.c.h.b16 %v201
    %v738 = vunpack.c.l.b16 %v202
    %v739 = vunpack.c.h.b16 %v202
    %v740 = vunpack.c.l.b16 %v203
    %v741 = vunpack.c.h.b16 %v203
    %v742 = vunpack.c.l.b16 %v204
    %v743 = vunpack.c.h.b16 %v204
    %v744 = vunpack.c.l.b16 %v205
    %v745 = vunpack.c.h.b16 %v205
    %v746 = vunpack.c.l.b16 %v206
    %v747 = vunpack.c.h.b16 %v206
    %v748 = vunpack.c.l.b16 %v207
    %v749 = vunpack.c.h.b16 %v207
    %v750 = vunpack.c.l.b16 %v208
    %v751 = vunpack.c.h.b16 %v208
    %v752 = vunpack.c.l.b16 %v209
    %v753 = vunpack.c.h.b16 %v209
    %v754 = vunpack.c.l.b16 %v210
    %v755 = vunpack.c.h.b16 %v210
    %v756 = vunpack.c.l.b16 %v211
    %v757 = vunpack.c.h.b16 %v211
    %v758 = vunpack.c.l.b16 %v212
    %v759 = vunpack.c.h.b16 %v212
    %v760 = vunpack.c.l.b16 %v213
    %v761 = vunpack.c.h.b16 %v213
    %v762 = vunpack.c.l.b16 %v214
    %v763 = vunpack.c.h.b16 %v214
    %v764 = vunpack.c.l.b16 %v215
    %v765 = vunpack.c.h.b16 %v215
    %v766 = vunpack.c.l.b16 %v216
    %v767 = vunpack.c.h.b16 %v216
    %v768 = vunpack.c.l.b16 %v217
    %v769 = vunpack.c.h.b16 %v217
    %v770 = vunpack.c.l.b16 %v218
    %v771 = vunpack.c.h.b16 %v218
    %v772 = vunpack.c.l.b16 %v219
    %v773 = vunpack.c.h.b16 %v219
    %v774 = vunpack.c.l.b16 %v220
    %v775 = vunpack.c.h.b16 %v220
    %v776 = vunpack.c.l.b16 %v221
    %v777 = vunpack.c.h.b16 %v221
    %v778 = vunpack.c.l.b16 %v222
    %v779 = vunpack.c.h.b16 %v222
    %v780 = vunpack.c.l.b16 %v223
    %v781 = vunpack.c.h.b16 %v223
    %v782 = vunpack.c.l.b16 %v224
    %v783 = vunpack.c.h.b16 %v224
    %v784 = vunpack.c.l.b16 %v225
    %v785 = vunpack.c.h.b16 %v225
    %v786 = vunpack.c.l.b16 %v226
    %v787 = vunpack.c.h.b16 %v226
    %v788 = vunpack.c.l.b16 %v227
    %v789 = vunpack.c.h.b16 %v227
    %v790 = vunpack.c.l.b16 %v228
    %v791 = vunpack.c.h.b16 %v228
    %v792 = vunpack.c.l.b16 %v229
    %v793 = vunpack.c.h.b16 %v229
    %v794 = vunpack.c.l.b16 %v230
    %v795 = vunpack.c.h.b16 %v230
    %v796 = vunpack.c.l.b16 %v231
    %v797 = vunpack.c.h.b16 %v231
    %v798 = vunpack.c.l.b16 %v232
    %v799 = vunpack.c.h.b16 %v232
    %v800 = vunpack.c.l.b16 %v233
    %v801 = vunpack.c.h.b16 %v233
    %v802 = vunpack.c.l.b16 %v234
    %v803 = vunpack.c.h.b16 %v234
    %v804 = vunpack.c.l.b16 %v235
    %v805 = vunpack.c.h.b16 %v235
    %v806 = vunpack.c.l.b16 %v236
    %v807 = vunpack.c.h.b16 %v236
    %v808 = vunpack.c.l.b16 %v237
    %v809 = vunpack.c.h.b16 %v237
    %v810 = vunpack.c.l.b16 %v238
    %v811 = vunpack.c.h.b16 %v238
    %v812 = vunpack.c.l.b16 %v239
    %v813 = vunpack.c.h.b16 %v239
    %v814 = vunpack.c.l.b16 %v240
    %v815 = vunpack.c.h.b16 %v240
    %v816 = vunpack.c.l.b16 %v241
    %v817 = vunpack.c.h.b16 %v241
    %v818 = vunpack.c.l.b16 %v242
    %v819 = vunpack.c.h.b16 %v242
    %v820 = vunpack.c.l.b16 %v243
    %v821 = vunpack.c.h.b16 %v243
    %v822 = vunpack.c.l.b16 %v244
    %v823 = vunpack.c.h.b16 %v244
    %v824 = vunpack.c.l.b16 %v245
    %v825 = vunpack.c.h.b16 %v245
    %v826 = vunpack.c.l.b16 %v246
    %v827 = vunpack.c.h.b16 %v246
    %v828 = vunpack.c.l.b16 %v247
    %v829 = vunpack.c.h.b16 %v247
    %v830 = vunpack.c.l.b16 %v248
    %v831 = vunpack.c.h.b16 %v248
    %v832 = vunpack.c.l.b16 %v249
    %v833 = vunpack.c.h.b16 %v249
    %v834 = vunpack.c.l.b16 %v250
    %v835 = vunpack.c.h.b16 %v250
    %v836 = vunpack.c.l.b16 %v251
    %v837 = vunpack.c.h.b16 %v251
    %v838 = vunpack.c.l.b16 %v252
    %v839 = vunpack.c.h.b16 %v252
    %v840 = vunpack.c.l.b16 %v253
    %v841 = vunpack.c.h.b16 %v253
    %v842 = vunpack.c.l.b16 %v254
    %v843 = vunpack.c.h.b16 %v254
    %v844 = vunpack.c.l.b16 %v255
    %v845 = vunpack.c.h.b16 %v255
    %v846 = vunpack.c.l.b16 %v256
    %v847 = vunpack.c.h.b16 %v256
    %v848 = vunpack.c.l.b16 %v257
    %v849 = vunpack.c.h.b16 %v257
    %v850 = vunpack.c.l.b16 %v258
    %v851 = vunpack.c.h.b16 %v258
    %v852 = vunpack.c.l.b16 %v259
    %v853 = vunpack.c.h.b16 %v259
    %v854 = vunpack.c.l.b16 %v260
    %v855 = vunpack.c.h.b16 %v260
    %v856 = vunpack.c.l.b16 %v261
    %v857 = vunpack.c.h.b16 %v261
    %v858 = vunpack.c.l.b16 %v262
    %v859 = vunpack.c.h.b16 %v262
    %v860 = vunpack.c.l.b16 %v263
    %v861 = vunpack.c.h.b16 %v263
    %v862 = vunpack.c.l.b16 %v264
    %v863 = vunpack.c.h.b16 %v264
    %v864 = vunpack.c.l.b16 %v265
    %v865 = vunpack.c.h.b16 %v265
    %v866 = vunpack.c.l.b16 %v266
    %v867 = vunpack.c.h.b16 %v266
    %v868 = vunpack.c.l.b16 %v267
    %v869 = vunpack.c.h.b16 %v267
    %v870 = vunpack.c.l.b16 %v268
    %v871 = vunpack.c.h.b16 %v268
    %v872 = vpack.c.b16 %v484, %v480
    %v873 = vpack.c.b16 %v485, %v481
    %v874 = vpack.c.b16 %v486, %v482
    %v875 = vpack.c.b16 %v487, %v483
    %v876 = vpack.c.b16 %v492, %v488
    %v877 = vpack.c.b16 %v493, %v489
    %v878 = vpack.c.b16 %v494, %v490
    %v879 = vpack.c.b16 %v495, %v491
    %v880 = vpack.c.b16 %v500, %v496
    %v881 = vpack.c.b16 %v501, %v497
    %v882 = vpack.c.b16 %v502, %v498
    %v883 = vpack.c.b16 %v503, %v499
    %v884 = vpack.c.b16 %v508, %v504
    %v885 = vpack.c.b16 %v509, %v505
    %v886 = vpack.c.b16 %v510, %v506
    %v887 = vpack.c.b16 %v511, %v507
    %v888 = vpack.c.b16 %v516, %v512
    %v889 = vpack.c.b16 %v517, %v513
    %v890 = vpack.c.b16 %v518, %v514
    %v891 = vpack.c.b16 %v519, %v515
    %v892 = vpack.c.b16 %v524, %v520
    %v893 = vpack.c.b16 %v525, %v521
    %v894 = vpack.c.b16 %v526, %v522
    %v895 = vpack.c.b16 %v527, %v523
    %v896 = vpack.c.b16 %v532, %v528
    %v897 = vpack.c.b16 %v533, %v529
    %v898 = vpack.c.b16 %v534, %v530
    %v899 = vpack.c.b16 %v535, %v531
    %v900 = vpack.c.b16 %v540, %v536
    %v901 = vpack.c.b16 %v541, %v537
    %v902 = vpack.c.b16 %v542, %v538
    %v903 = vpack.c.b16 %v543, %v539
    %v904 = vpack.c.b16 %v548, %v544
    %v905 = vpack.c.b16 %v549, %v545
    %v906 = vpack.c.b16 %v550, %v546
    %v907 = vpack.c.b16 %v551, %v547
    %v908 = vpack.c.b16 %v556, %v552
    %v909 = vpack.c.b16 %v557, %v553
    %v910 = vpack.c.b16 %v558, %v554
    %v911 = vpack.c.b16 %v559, %v555
    %v912 = vpack.c.b16 %v564, %v560
    %v913 = vpack.c.b16 %v565, %v561
    %v914 = vpack.c.b16 %v566, %v562
    %v915 = vpack.c.b16 %v567, %v563
    %v916 = vpack.c.b16 %v572, %v568
    %v917 = vpack.c.b16 %v573, %v569
    %v918 = vpack.c.b16 %v574, %v570
    %v919 = vpack.c.b16 %v575, %v571
    %v920 = vpack.c.b16 %v580, %v576
    %v921 = vpack.c.b16 %v581, %v577
    %v922 = vpack.c.b16 %v582, %v578
    %v923 = vpack.c.b16 %v583, %v579
    %v924 = vpack.c.b16 %v588, %v584
    %v925 = vpack.c.b16 %v589, %v585
    %v926 = vpack.c.b16 %v590, %v586
    %v927 = vpack.c.b16 %v591, %v587
    %v928 = vpack.c.b16 %v596, %v592
    %v929 = vpack.c.b16 %v597, %v593
    %v930 = vpack.c.b16 %v598, %v594
    %v931 = vpack.c.b16 %v599, %v595
    %v932 = vpack.c.b16 %v604, %v600
    %v933 = vpack.c.b16 %v605, %v601
    %v934 = vpack.c.b16 %v606, %v602
    %v935 = vpack.c.b16 %v607, %v603
    %v936 = vpack.c.b16 %v612, %v608
    %v937 = vpack.c.b16 %v613, %v609
    %v938 = vpack.c.b16 %v614, %v610
    %v939 = vpack.c.b16 %v615, %v611
    %v940 = vpack.c.b16 %v620, %v616
    %v941 = vpack.c.b16 %v621, %v617
    %v942 = vpack.c.b16 %v622, %v618
    %v943 = vpack.c.b16 %v623, %v619
    %v944 = vpack.c.b16 %v628, %v624
    %v945 = vpack.c.b16 %v629, %v625
    %v946 = vpack.c.b16 %v630, %v626
    %v947 = vpack.c.b16 %v631, %v627
    %v948 = vpack.c.b16 %v636, %v632
    %v949 = vpack.c.b16 %v637, %v633
    %v950 = vpack.c.b16 %v638, %v634
    %v951 = vpack.c.b16 %v639, %v635
    %v952 = vpack.c.b16 %v644, %v640
    %v953 = vpack.c.b16 %v645, %v641
    %v954 = vpack.c.b16 %v646, %v642
    %v955 = vpack.c.b16 %v647, %v643
    %v956 = vpack.c.b16 %v652, %v648
    %v957 = vpack.c.b16 %v653, %v649
    %v958 = vpack.c.b16 %v654, %v650
    %v959 = vpack.c.b16 %v655, %v651
    %v960 = vpack.c.b16 %v660, %v656
    %v961 = vpack.c.b16 %v661, %v657
    %v962 = vpack.c.b16 %v662, %v658
    %v963 = vpack.c.b16 %v663, %v659
    %v964 = vpack.c.b16 %v668, %v664
    %v965 = vpack.c.b16 %v669, %v665
    %v966 = vpack.c.b16 %v670, %v666
    %v967 = vpack.c.b16 %v671, %v667
    %v968 = vpack.c.b16 %v676, %v672
    %v969 = vpack.c.b16 %v677, %v673
    %v970 = vpack.c.b16 %v678, %v674
    %v971 = vpack.c.b16 %v679, %v675
    %v972 = vpack.c.b16 %v684, %v680
    %v973 = vpack.c.b16 %v685, %v681
    %v974 = vpack.c.b16 %v686, %v682
    %v975 = vpack.c.b16 %v687, %v683
    %v976 = vpack.c.b16 %v692, %v688
    %v977 = vpack.c.b16 %v693, %v689
    %v978 = vpack.c.b16 %v694, %v690
    %v979 = vpack.c.b16 %v695, %v691
    %v980 = vpack.c.b16 %v700, %v696
    %v981 = vpack.c.b16 %v701, %v697
    %v982 = vpack.c.b16 %v702, %v698
    %v983 = vpack.c.b16 %v703, %v699
    %v984 = vpack.c.b16 %v708, %v704
    %v985 = vpack.c.b16 %v709, %v705
    %v986 = vpack.c.b16 %v710, %v706
    %v987 = vpack.c.b16 %v711, %v707
    %v988 = vpack.c.b16 %v716, %v712
    %v989 = vpack.c.b16 %v717, %v713
    %v990 = vpack.c.b16 %v718, %v714
    %v991 = vpack.c.b16 %v719, %v715
    %v992 = vpack.c.b16 %v724, %v720
    %v993 = vpack.c.b16 %v725, %v721
    %v994 = vpack.c.b16 %v726, %v722
    %v995 = vpack.c.b16 %v727, %v723
    %v996 = vpack.c.b16 %v732, %v728
    %v997 = vpack.c.b16 %v733, %v729
    %v998 = vpack.c.b16 %v734, %v730
    %v999 = vpack.c.b16 %v735, %v731
    %v1000 = vpack.c.b16 %v740, %v736
    %v1001 = vpack.c.b16 %v741, %v737
    %v1002 = vpack.c.b16 %v742, %v738
    %v1003 = vpack.c.b16 %v743, %v739
    %v1004 = vpack.c.b16 %v748, %v744
    %v1005 = vpack.c.b16 %v749, %v745
    %v1006 = vpack.c.b16 %v750, %v746
    %v1007 = vpack.c.b16 %v751, %v747
    %v1008 = vpack.c.b16 %v756, %v752
    %v1009 = vpack.c.b16 %v757, %v753
    %v1010 = vpack.c.b16 %v758, %v754
    %v1011 = vpack.c.b16 %v759, %v755
    %v1012 = vpack.c.b16 %v764, %v760
    %v1013 = vpack.c.b16 %v765, %v761
    %v1014 = vpack.c.b16 %v766, %v762
    %v1015 = vpack.c.b16 %v767, %v763
    %v1016 = vpack.c.b16 %v772, %v768
    %v1017 = vpack.c.b16 %v773, %v769
    %v1018 = vpack.c.b16 %v774, %v770
    %v1019 = vpack.c.b16 %v775, %v771
    %v1020 = vpack.c.b16 %v780, %v776
    %v1021 = vpack.c.b16 %v781, %v777
    %v1022 = vpack.c.b16 %v782, %v778
    %v1023 = vpack.c.b16 %v783, %v779
    %v1024 = vpack.c.b16 %v788, %v784
    %v1025 = vpack.c.b16 %v789, %v785
    %v1026 = vpack.c.b16 %v790, %v786
    %v1027 = vpack.c.b16 %v791, %v787
    %v1028 = vpack.c.b16 %v796, %v792
    %v1029 = vpack.c.b16 %v797, %v793
    %v1030 = vpack.c.b16 %v798, %v794
    %v1031 = vpack.c.b16 %v799, %v795
    %v1032 = vpack.c.b16 %v804, %v800
    %v1033 = vpack.c.b16 %v805, %v801
    %v1034 = vpack.c.b16 %v806, %v802
    %v1035 = vpack.c.b16 %v807, %v803
    %v1036 = vpack.c.b16 %v812, %v808
    %v1037 = vpack.c.b16 %v813, %v809
    %v1038 = vpack.c.b16 %v814, %v810
    %v1039 = vpack.c.b16 %v815, %v811
    %v1040 = vpack.c.b16 %v820, %v816
    %v1041 = vpack.c.b16 %v821, %v817
    %v1042 = vpack.c.b16 %v822, %v818
    %v1043 = vpack.c.b16 %v823, %v819
    %v1044 = vpack.c.b16 %v828, %v824
    %v1045 = vpack.c.b16 %v829, %v825
    %v1046 = vpack.c.b16 %v830, %v826
    %v1047 = vpack.c.b16 %v831, %v827
    %v1048 = vpack.c.b16 %v836, %v832
    %v1049 = vpack.c.b16 %v837, %v833
    %v1050 = vpack.c.b16 %v838, %v834
    %v1051 = vpack.c.b16 %v839, %v835
    %v1052 = vpack.c.b16 %v844, %v840
    %v1053 = vpack.c.b16 %v845, %v841
    %v1054 = vpack.c.b16 %v846, %v842
    %v1055 = vpack.c.b16 %v847, %v843
    %v1056 = vpack.c.b16 %v852, %v848
    %v1057 = vpack.c.b16 %v853, %v849
    %v1058 = vpack.c.b16 %v854, %v850
    %v1059 = vpack.c.b16 %v855, %v851
    %v1060 = vpack.c.b16 %v860, %v856
    %v1061 = vpack.c.b16 %v861, %v857
    %v1062 = vpack.c.b16 %v862, %v858
    %v1063 = vpack.c.b16 %v863, %v859
    %v1064 = vpack.c.b16 %v868, %v864
    %v1065 = vpack.c.b16 %v869, %v865
    %v1066 = vpack.c.b16 %v870, %v866
    %v1067 = vpack.c.b16 %v871, %v867
    %vm1264 = vcmask 130048
    %v1266 = vsel %vm1264, %v72, 0
    %1268 = vmatpush.bf16.msra.mxu0 %v900
    %1269 = vmatpush.bf16.msra.mxu0 %v896
    %1270 = vmatpush.bf16.msra.mxu0 %v892
    %1271 = vmatpush.bf16.msra.mxu0 %v888
    %1272 = vmatpush.bf16.msra.mxu0 %v884
    %1273 = vmatpush.bf16.msra.mxu0 %v880
    %1274 = vmatpush.bf16.msra.mxu0 %v876
    %1275 = vmatpush.bf16.msra.mxu0 %v872
    %1276 = vmatmul.bf16.gmra.mxu0 %v66
    %v1277 = vpop.f32.mrf.mxu0
    %v1278 = vadd.f32 %v280, %v1277
    %v1279 = vpop.f32.mrf.mxu0
    %1280 = vdwg.mxu0
    %1281 = vmatpush.bf16.msra.mxu0 %v932
    %1282 = vmatpush.bf16.msra.mxu0 %v928
    %1283 = vmatpush.bf16.msra.mxu0 %v924
    %1284 = vmatpush.bf16.msra.mxu0 %v920
    %1285 = vmatpush.bf16.msra.mxu0 %v916
    %1286 = vmatpush.bf16.msra.mxu0 %v912
    %1287 = vmatpush.bf16.msra.mxu0 %v908
    %1288 = vmatpush.bf16.msra.mxu0 %v904
    %1289 = vmatmul.bf16.gmra.mxu0 %v67
    %v1290 = vpop.f32.mrf.mxu0
    %v1291 = vadd.f32 %v1278, %v1290
    %v1292 = vpop.f32.mrf.mxu0
    %1293 = vdwg.mxu0
    %1294 = vmatpush.bf16.msra.mxu0 %v964
    %1295 = vmatpush.bf16.msra.mxu0 %v960
    %1296 = vmatpush.bf16.msra.mxu0 %v956
    %1297 = vmatpush.bf16.msra.mxu0 %v952
    %1298 = vmatpush.bf16.msra.mxu0 %v948
    %1299 = vmatpush.bf16.msra.mxu0 %v944
    %1300 = vmatpush.bf16.msra.mxu0 %v940
    %1301 = vmatpush.bf16.msra.mxu0 %v936
    %1302 = vmatmul.bf16.gmra.mxu0 %v68
    %v1303 = vpop.f32.mrf.mxu0
    %v1304 = vadd.f32 %v1291, %v1303
    %v1305 = vpop.f32.mrf.mxu0
    %1306 = vdwg.mxu0
    %1307 = vmatpush.bf16.msra.mxu0 %v996
    %1308 = vmatpush.bf16.msra.mxu0 %v992
    %1309 = vmatpush.bf16.msra.mxu0 %v988
    %1310 = vmatpush.bf16.msra.mxu0 %v984
    %1311 = vmatpush.bf16.msra.mxu0 %v980
    %1312 = vmatpush.bf16.msra.mxu0 %v976
    %1313 = vmatpush.bf16.msra.mxu0 %v972
    %1314 = vmatpush.bf16.msra.mxu0 %v968
    %1315 = vmatmul.bf16.gmra.mxu0 %v69
    %v1316 = vpop.f32.mrf.mxu0
    %v1317 = vadd.f32 %v1304, %v1316
    %v1318 = vpop.f32.mrf.mxu0
    %1319 = vdwg.mxu0
    %1320 = vmatpush.bf16.msra.mxu0 %v1028
    %1321 = vmatpush.bf16.msra.mxu0 %v1024
    %1322 = vmatpush.bf16.msra.mxu0 %v1020
    %1323 = vmatpush.bf16.msra.mxu0 %v1016
    %1324 = vmatpush.bf16.msra.mxu0 %v1012
    %1325 = vmatpush.bf16.msra.mxu0 %v1008
    %1326 = vmatpush.bf16.msra.mxu0 %v1004
    %1327 = vmatpush.bf16.msra.mxu0 %v1000
    %1328 = vmatmul.bf16.gmra.mxu0 %v70
    %v1329 = vpop.f32.mrf.mxu0
    %v1330 = vadd.f32 %v1317, %v1329
    %v1331 = vpop.f32.mrf.mxu0
    %1332 = vdwg.mxu0
    %1333 = vmatpush.bf16.msra.mxu0 %v1060
    %1334 = vmatpush.bf16.msra.mxu0 %v1056
    %1335 = vmatpush.bf16.msra.mxu0 %v1052
    %1336 = vmatpush.bf16.msra.mxu0 %v1048
    %1337 = vmatpush.bf16.msra.mxu0 %v1044
    %1338 = vmatpush.bf16.msra.mxu0 %v1040
    %1339 = vmatpush.bf16.msra.mxu0 %v1036
    %1340 = vmatpush.bf16.msra.mxu0 %v1032
    %1341 = vmatmul.bf16.gmra.mxu0 %v71
    %v1342 = vpop.f32.mrf.mxu0
    %v1343 = vadd.f32 %v1330, %v1342
    %v1344 = vpop.f32.mrf.mxu0
    %1345 = vdwg.mxu0
    %1346 = vmatpush.bf16.msra.mxu0 0
    %1347 = vmatpush.bf16.msra.mxu0 0
    %1348 = vmatpush.bf16.msra.mxu0 0
    %1349 = vmatpush.bf16.msra.mxu0 0
    %1350 = vmatpush.bf16.msra.mxu0 0
    %1351 = vmatpush.bf16.msra.mxu0 0
    %1352 = vmatpush.bf16.msra.mxu0 0
    %1353 = vmatpush.bf16.msra.mxu0 %v1064
    %1354 = vmatmul.bf16.gmra.mxu0 %v1266
    %v1355 = vpop.f32.mrf.mxu0
    %v1356 = vadd.f32 %v1343, %v1355
    %v1357 = vpop.f32.mrf.mxu0
    %1358 = vdwg.mxu0
    %1359 = vmatpush.bf16.msra.mxu0 %v901
    %1360 = vmatpush.bf16.msra.mxu0 %v897
    %1361 = vmatpush.bf16.msra.mxu0 %v893
    %1362 = vmatpush.bf16.msra.mxu0 %v889
    %1363 = vmatpush.bf16.msra.mxu0 %v885
    %1364 = vmatpush.bf16.msra.mxu0 %v881
    %1365 = vmatpush.bf16.msra.mxu0 %v877
    %1366 = vmatpush.bf16.msra.mxu0 %v873
    %1367 = vmatmul.bf16.gmra.mxu0 %v66
    %v1368 = vpop.f32.mrf.mxu0
    %v1369 = vadd.f32 %v281, %v1368
    %v1370 = vpop.f32.mrf.mxu0
    %1371 = vdwg.mxu0
    %1372 = vmatpush.bf16.msra.mxu0 %v933
    %1373 = vmatpush.bf16.msra.mxu0 %v929
    %1374 = vmatpush.bf16.msra.mxu0 %v925
    %1375 = vmatpush.bf16.msra.mxu0 %v921
    %1376 = vmatpush.bf16.msra.mxu0 %v917
    %1377 = vmatpush.bf16.msra.mxu0 %v913
    %1378 = vmatpush.bf16.msra.mxu0 %v909
    %1379 = vmatpush.bf16.msra.mxu0 %v905
    %1380 = vmatmul.bf16.gmra.mxu0 %v67
    %v1381 = vpop.f32.mrf.mxu0
    %v1382 = vadd.f32 %v1369, %v1381
    %v1383 = vpop.f32.mrf.mxu0
    %1384 = vdwg.mxu0
    %1385 = vmatpush.bf16.msra.mxu0 %v965
    %1386 = vmatpush.bf16.msra.mxu0 %v961
    %1387 = vmatpush.bf16.msra.mxu0 %v957
    %1388 = vmatpush.bf16.msra.mxu0 %v953
    %1389 = vmatpush.bf16.msra.mxu0 %v949
    %1390 = vmatpush.bf16.msra.mxu0 %v945
    %1391 = vmatpush.bf16.msra.mxu0 %v941
    %1392 = vmatpush.bf16.msra.mxu0 %v937
    %1393 = vmatmul.bf16.gmra.mxu0 %v68
    %v1394 = vpop.f32.mrf.mxu0
    %v1395 = vadd.f32 %v1382, %v1394
    %v1396 = vpop.f32.mrf.mxu0
    %1397 = vdwg.mxu0
    %1398 = vmatpush.bf16.msra.mxu0 %v997
    %1399 = vmatpush.bf16.msra.mxu0 %v993
    %1400 = vmatpush.bf16.msra.mxu0 %v989
    %1401 = vmatpush.bf16.msra.mxu0 %v985
    %1402 = vmatpush.bf16.msra.mxu0 %v981
    %1403 = vmatpush.bf16.msra.mxu0 %v977
    %1404 = vmatpush.bf16.msra.mxu0 %v973
    %1405 = vmatpush.bf16.msra.mxu0 %v969
    %1406 = vmatmul.bf16.gmra.mxu0 %v69
    %v1407 = vpop.f32.mrf.mxu0
    %v1408 = vadd.f32 %v1395, %v1407
    %v1409 = vpop.f32.mrf.mxu0
    %1410 = vdwg.mxu0
    %1411 = vmatpush.bf16.msra.mxu0 %v1029
    %1412 = vmatpush.bf16.msra.mxu0 %v1025
    %1413 = vmatpush.bf16.msra.mxu0 %v1021
    %1414 = vmatpush.bf16.msra.mxu0 %v1017
    %1415 = vmatpush.bf16.msra.mxu0 %v1013
    %1416 = vmatpush.bf16.msra.mxu0 %v1009
    %1417 = vmatpush.bf16.msra.mxu0 %v1005
    %1418 = vmatpush.bf16.msra.mxu0 %v1001
    %1419 = vmatmul.bf16.gmra.mxu0 %v70
    %v1420 = vpop.f32.mrf.mxu0
    %v1421 = vadd.f32 %v1408, %v1420
    %v1422 = vpop.f32.mrf.mxu0
    %1423 = vdwg.mxu0
    %1424 = vmatpush.bf16.msra.mxu0 %v1061
    %1425 = vmatpush.bf16.msra.mxu0 %v1057
    %1426 = vmatpush.bf16.msra.mxu0 %v1053
    %1427 = vmatpush.bf16.msra.mxu0 %v1049
    %1428 = vmatpush.bf16.msra.mxu0 %v1045
    %1429 = vmatpush.bf16.msra.mxu0 %v1041
    %1430 = vmatpush.bf16.msra.mxu0 %v1037
    %1431 = vmatpush.bf16.msra.mxu0 %v1033
    %1432 = vmatmul.bf16.gmra.mxu0 %v71
    %v1433 = vpop.f32.mrf.mxu0
    %v1434 = vadd.f32 %v1421, %v1433
    %v1435 = vpop.f32.mrf.mxu0
    %1436 = vdwg.mxu0
    %1437 = vmatpush.bf16.msra.mxu0 0
    %1438 = vmatpush.bf16.msra.mxu0 0
    %1439 = vmatpush.bf16.msra.mxu0 0
    %1440 = vmatpush.bf16.msra.mxu0 0
    %1441 = vmatpush.bf16.msra.mxu0 0
    %1442 = vmatpush.bf16.msra.mxu0 0
    %1443 = vmatpush.bf16.msra.mxu0 0
    %1444 = vmatpush.bf16.msra.mxu0 %v1065
    %1445 = vmatmul.bf16.gmra.mxu0 %v1266
    %v1446 = vpop.f32.mrf.mxu0
    %v1447 = vadd.f32 %v1434, %v1446
    %v1448 = vpop.f32.mrf.mxu0
    %1449 = vdwg.mxu0
    %1450 = vmatpush.bf16.msra.mxu0 %v902
    %1451 = vmatpush.bf16.msra.mxu0 %v898
    %1452 = vmatpush.bf16.msra.mxu0 %v894
    %1453 = vmatpush.bf16.msra.mxu0 %v890
    %1454 = vmatpush.bf16.msra.mxu0 %v886
    %1455 = vmatpush.bf16.msra.mxu0 %v882
    %1456 = vmatpush.bf16.msra.mxu0 %v878
    %1457 = vmatpush.bf16.msra.mxu0 %v874
    %1458 = vmatmul.bf16.gmra.mxu0 %v66
    %v1459 = vpop.f32.mrf.mxu0
    %v1460 = vadd.f32 %v282, %v1459
    %v1461 = vpop.f32.mrf.mxu0
    %1462 = vdwg.mxu0
    %1463 = vmatpush.bf16.msra.mxu0 %v934
    %1464 = vmatpush.bf16.msra.mxu0 %v930
    %1465 = vmatpush.bf16.msra.mxu0 %v926
    %1466 = vmatpush.bf16.msra.mxu0 %v922
    %1467 = vmatpush.bf16.msra.mxu0 %v918
    %1468 = vmatpush.bf16.msra.mxu0 %v914
    %1469 = vmatpush.bf16.msra.mxu0 %v910
    %1470 = vmatpush.bf16.msra.mxu0 %v906
    %1471 = vmatmul.bf16.gmra.mxu0 %v67
    %v1472 = vpop.f32.mrf.mxu0
    %v1473 = vadd.f32 %v1460, %v1472
    %v1474 = vpop.f32.mrf.mxu0
    %1475 = vdwg.mxu0
    %1476 = vmatpush.bf16.msra.mxu0 %v966
    %1477 = vmatpush.bf16.msra.mxu0 %v962
    %1478 = vmatpush.bf16.msra.mxu0 %v958
    %1479 = vmatpush.bf16.msra.mxu0 %v954
    %1480 = vmatpush.bf16.msra.mxu0 %v950
    %1481 = vmatpush.bf16.msra.mxu0 %v946
    %1482 = vmatpush.bf16.msra.mxu0 %v942
    %1483 = vmatpush.bf16.msra.mxu0 %v938
    %1484 = vmatmul.bf16.gmra.mxu0 %v68
    %v1485 = vpop.f32.mrf.mxu0
    %v1486 = vadd.f32 %v1473, %v1485
    %v1487 = vpop.f32.mrf.mxu0
    %1488 = vdwg.mxu0
    %1489 = vmatpush.bf16.msra.mxu0 %v998
    %1490 = vmatpush.bf16.msra.mxu0 %v994
    %1491 = vmatpush.bf16.msra.mxu0 %v990
    %1492 = vmatpush.bf16.msra.mxu0 %v986
    %1493 = vmatpush.bf16.msra.mxu0 %v982
    %1494 = vmatpush.bf16.msra.mxu0 %v978
    %1495 = vmatpush.bf16.msra.mxu0 %v974
    %1496 = vmatpush.bf16.msra.mxu0 %v970
    %1497 = vmatmul.bf16.gmra.mxu0 %v69
    %v1498 = vpop.f32.mrf.mxu0
    %v1499 = vadd.f32 %v1486, %v1498
    %v1500 = vpop.f32.mrf.mxu0
    %1501 = vdwg.mxu0
    %1502 = vmatpush.bf16.msra.mxu0 %v1030
    %1503 = vmatpush.bf16.msra.mxu0 %v1026
    %1504 = vmatpush.bf16.msra.mxu0 %v1022
    %1505 = vmatpush.bf16.msra.mxu0 %v1018
    %1506 = vmatpush.bf16.msra.mxu0 %v1014
    %1507 = vmatpush.bf16.msra.mxu0 %v1010
    %1508 = vmatpush.bf16.msra.mxu0 %v1006
    %1509 = vmatpush.bf16.msra.mxu0 %v1002
    %1510 = vmatmul.bf16.gmra.mxu0 %v70
    %v1511 = vpop.f32.mrf.mxu0
    %v1512 = vadd.f32 %v1499, %v1511
    %v1513 = vpop.f32.mrf.mxu0
    %1514 = vdwg.mxu0
    %1515 = vmatpush.bf16.msra.mxu0 %v1062
    %1516 = vmatpush.bf16.msra.mxu0 %v1058
    %1517 = vmatpush.bf16.msra.mxu0 %v1054
    %1518 = vmatpush.bf16.msra.mxu0 %v1050
    %1519 = vmatpush.bf16.msra.mxu0 %v1046
    %1520 = vmatpush.bf16.msra.mxu0 %v1042
    %1521 = vmatpush.bf16.msra.mxu0 %v1038
    %1522 = vmatpush.bf16.msra.mxu0 %v1034
    %1523 = vmatmul.bf16.gmra.mxu0 %v71
    %v1524 = vpop.f32.mrf.mxu0
    %v1525 = vadd.f32 %v1512, %v1524
    %v1526 = vpop.f32.mrf.mxu0
    %1527 = vdwg.mxu0
    %1528 = vmatpush.bf16.msra.mxu0 0
    %1529 = vmatpush.bf16.msra.mxu0 0
    %1530 = vmatpush.bf16.msra.mxu0 0
    %1531 = vmatpush.bf16.msra.mxu0 0
    %1532 = vmatpush.bf16.msra.mxu0 0
    %1533 = vmatpush.bf16.msra.mxu0 0
    %1534 = vmatpush.bf16.msra.mxu0 0
    %1535 = vmatpush.bf16.msra.mxu0 %v1066
    %1536 = vmatmul.bf16.gmra.mxu0 %v1266
    %v1537 = vpop.f32.mrf.mxu0
    %v1538 = vadd.f32 %v1525, %v1537
    %v1539 = vpop.f32.mrf.mxu0
    %1540 = vdwg.mxu0
    %1541 = vmatpush.bf16.msra.mxu0 %v903
    %1542 = vmatpush.bf16.msra.mxu0 %v899
    %1543 = vmatpush.bf16.msra.mxu0 %v895
    %1544 = vmatpush.bf16.msra.mxu0 %v891
    %1545 = vmatpush.bf16.msra.mxu0 %v887
    %1546 = vmatpush.bf16.msra.mxu0 %v883
    %1547 = vmatpush.bf16.msra.mxu0 %v879
    %1548 = vmatpush.bf16.msra.mxu0 %v875
    %1549 = vmatmul.bf16.gmra.mxu0 %v66
    %v1550 = vpop.f32.mrf.mxu0
    %v1551 = vadd.f32 %v283, %v1550
    %v1552 = vpop.f32.mrf.mxu0
    %1553 = vdwg.mxu0
    %1554 = vmatpush.bf16.msra.mxu0 %v935
    %1555 = vmatpush.bf16.msra.mxu0 %v931
    %1556 = vmatpush.bf16.msra.mxu0 %v927
    %1557 = vmatpush.bf16.msra.mxu0 %v923
    %1558 = vmatpush.bf16.msra.mxu0 %v919
    %1559 = vmatpush.bf16.msra.mxu0 %v915
    %1560 = vmatpush.bf16.msra.mxu0 %v911
    %1561 = vmatpush.bf16.msra.mxu0 %v907
    %1562 = vmatmul.bf16.gmra.mxu0 %v67
    %v1563 = vpop.f32.mrf.mxu0
    %v1564 = vadd.f32 %v1551, %v1563
    %v1565 = vpop.f32.mrf.mxu0
    %1566 = vdwg.mxu0
    %1567 = vmatpush.bf16.msra.mxu0 %v967
    %1568 = vmatpush.bf16.msra.mxu0 %v963
    %1569 = vmatpush.bf16.msra.mxu0 %v959
    %1570 = vmatpush.bf16.msra.mxu0 %v955
    %1571 = vmatpush.bf16.msra.mxu0 %v951
    %1572 = vmatpush.bf16.msra.mxu0 %v947
    %1573 = vmatpush.bf16.msra.mxu0 %v943
    %1574 = vmatpush.bf16.msra.mxu0 %v939
    %1575 = vmatmul.bf16.gmra.mxu0 %v68
    %v1576 = vpop.f32.mrf.mxu0
    %v1577 = vadd.f32 %v1564, %v1576
    %v1578 = vpop.f32.mrf.mxu0
    %1579 = vdwg.mxu0
    %1580 = vmatpush.bf16.msra.mxu0 %v999
    %1581 = vmatpush.bf16.msra.mxu0 %v995
    %1582 = vmatpush.bf16.msra.mxu0 %v991
    %1583 = vmatpush.bf16.msra.mxu0 %v987
    %1584 = vmatpush.bf16.msra.mxu0 %v983
    %1585 = vmatpush.bf16.msra.mxu0 %v979
    %1586 = vmatpush.bf16.msra.mxu0 %v975
    %1587 = vmatpush.bf16.msra.mxu0 %v971
    %1588 = vmatmul.bf16.gmra.mxu0 %v69
    %v1589 = vpop.f32.mrf.mxu0
    %v1590 = vadd.f32 %v1577, %v1589
    %v1591 = vpop.f32.mrf.mxu0
    %1592 = vdwg.mxu0
    %1593 = vmatpush.bf16.msra.mxu0 %v1031
    %1594 = vmatpush.bf16.msra.mxu0 %v1027
    %1595 = vmatpush.bf16.msra.mxu0 %v1023
    %1596 = vmatpush.bf16.msra.mxu0 %v1019
    %1597 = vmatpush.bf16.msra.mxu0 %v1015
    %1598 = vmatpush.bf16.msra.mxu0 %v1011
    %1599 = vmatpush.bf16.msra.mxu0 %v1007
    %1600 = vmatpush.bf16.msra.mxu0 %v1003
    %1601 = vmatmul.bf16.gmra.mxu0 %v70
    %v1602 = vpop.f32.mrf.mxu0
    %v1603 = vadd.f32 %v1590, %v1602
    %v1604 = vpop.f32.mrf.mxu0
    %1605 = vdwg.mxu0
    %1606 = vmatpush.bf16.msra.mxu0 %v1063
    %1607 = vmatpush.bf16.msra.mxu0 %v1059
    %1608 = vmatpush.bf16.msra.mxu0 %v1055
    %1609 = vmatpush.bf16.msra.mxu0 %v1051
    %1610 = vmatpush.bf16.msra.mxu0 %v1047
    %1611 = vmatpush.bf16.msra.mxu0 %v1043
    %1612 = vmatpush.bf16.msra.mxu0 %v1039
    %1613 = vmatpush.bf16.msra.mxu0 %v1035
    %1614 = vmatmul.bf16.gmra.mxu0 %v71
    %v1615 = vpop.f32.mrf.mxu0
    %v1616 = vadd.f32 %v1603, %v1615
    %v1617 = vpop.f32.mrf.mxu0
    %1618 = vdwg.mxu0
    %1619 = vmatpush.bf16.msra.mxu0 0
    %1620 = vmatpush.bf16.msra.mxu0 0
    %1621 = vmatpush.bf16.msra.mxu0 0
    %1622 = vmatpush.bf16.msra.mxu0 0
    %1623 = vmatpush.bf16.msra.mxu0 0
    %1624 = vmatpush.bf16.msra.mxu0 0
    %1625 = vmatpush.bf16.msra.mxu0 0
    %1626 = vmatpush.bf16.msra.mxu0 %v1067
    %1627 = vmatmul.bf16.gmra.mxu0 %v1266
    %v1628 = vpop.f32.mrf.mxu0
    %v1629 = vadd.f32 %v1616, %v1628
    %v1630 = vpop.f32.mrf.mxu0
    %1631 = vdwg.mxu0
    %v1632 = vmax.f32 %v1356, 0.0
    %v1633 = vmax.f32 %v1447, 0.0
    %v1634 = vmax.f32 %v1538, 0.0
    %v1635 = vmax.f32 %v1629, 0.0
    %v1636 = vpack.c.bf16 %v1632, %v1632
    %v1637 = vpack.c.bf16 %v1633, %v1633
    %v1638 = vpack.c.bf16 %v1634, %v1634
    %v1639 = vpack.c.bf16 %v1635, %v1635
    %v1640 = vld [vmem:[#allocation4] sm:$0xff]
    %v1641 = vld [vmem:[#allocation4 + $0x8] sm:$0xff]
    %v1642 = vld [vmem:[#allocation4 + $0x10] sm:$0xff]
    %v1643 = vld [vmem:[#allocation4 + $0x18] sm:$0xff]
    %v1644 = vld [vmem:[#allocation4 + $0x20] sm:$0xff]
    %v1645 = vld [vmem:[#allocation4 + $0x28] sm:$0xff]
    %v1646 = vld [vmem:[#allocation4 + $0x30] sm:$0xff]
    %v1647 = vld [vmem:[#allocation4 + $0x38] sm:$0xff]
    %v1648 = vld [vmem:[#allocation4 + $0x40] sm:$0xff]
    %v1649 = vld [vmem:[#allocation4 + $0x48] sm:$0xff]
    %v1650 = vld [vmem:[#allocation4 + $0x50] sm:$0xff]
    %v1651 = vld [vmem:[#allocation4 + $0x58] sm:$0xff]
    %v1652 = vld [vmem:[#allocation4 + $0x60] sm:$0xff]
    %v1653 = vld [vmem:[#allocation4 + $0x68] sm:$0xff]
    %v1654 = vld [vmem:[#allocation4 + $0x70] sm:$0xff]
    %v1655 = vld [vmem:[#allocation4 + $0x78] sm:$0xff]
    %v1656 = vld [vmem:[#allocation4 + $0x80] sm:$0xff]
    %v1657 = vld [vmem:[#allocation4 + $0x88] sm:$0xff]
    %v1658 = vld [vmem:[#allocation4 + $0x90] sm:$0xff]
    %v1659 = vld [vmem:[#allocation4 + $0x98] sm:$0xff]
    %v1660 = vld [vmem:[#allocation4 + $0xa0] sm:$0xff]
    %v1661 = vld [vmem:[#allocation4 + $0xa8] sm:$0xff]
    %v1662 = vld [vmem:[#allocation4 + $0xb0] sm:$0xff]
    %v1663 = vld [vmem:[#allocation4 + $0xb8] sm:$0xff]
    %v1664 = vld [vmem:[#allocation4 + $0xc0] sm:$0xff]
    %v1665 = vld [vmem:[#allocation4 + $0xc8] sm:$0xff]
    %v1666 = vld [vmem:[#allocation4 + $0xd0] sm:$0xff]
    %v1667 = vld [vmem:[#allocation4 + $0xd8] sm:$0xff]
    %v1668 = vld [vmem:[#allocation4 + $0xe0] sm:$0xff]
    %v1669 = vld [vmem:[#allocation4 + $0xe8] sm:$0xff]
    %v1670 = vld [vmem:[#allocation4 + $0xf0] sm:$0xff]
    %v1671 = vld [vmem:[#allocation4 + $0xf8] sm:$0xff]
    %v1672 = vld [vmem:[#allocation4 + $0x100] sm:$0xff]
    %v1673 = vld [vmem:[#allocation4 + $0x108] sm:$0xff]
    %v1674 = vld [vmem:[#allocation4 + $0x110] sm:$0xff]
    %v1675 = vld [vmem:[#allocation4 + $0x118] sm:$0xff]
    %v1676 = vld [vmem:[#allocation4 + $0x120] sm:$0xff]
    %v1677 = vld [vmem:[#allocation4 + $0x128] sm:$0xff]
    %v1678 = vld [vmem:[#allocation4 + $0x130] sm:$0xff]
    %v1679 = vld [vmem:[#allocation4 + $0x138] sm:$0xff]
    %v1680 = vld [vmem:[#allocation4 + $0x140] sm:$0xff]
    %v1681 = vld [vmem:[#allocation4 + $0x148] sm:$0xff]
    %v1682 = vld [vmem:[#allocation4 + $0x150] sm:$0xff]
    %v1683 = vld [vmem:[#allocation4 + $0x158] sm:$0xff]
    %v1684 = vld [vmem:[#allocation4 + $0x160] sm:$0xff]
    %v1685 = vld [vmem:[#allocation4 + $0x168] sm:$0xff]
    %v1686 = vld [vmem:[#allocation4 + $0x170] sm:$0xff]
    %v1687 = vld [vmem:[#allocation4 + $0x178] sm:$0xff]
    %v1688 = vld [vmem:[#allocation4 + $0x180] sm:$0xff]
    %v1689 = vld [vmem:[#allocation4 + $0x188] sm:$0xff]
    %v1690 = vld [vmem:[#allocation4 + $0x190] sm:$0xff]
    %v1691 = vld [vmem:[#allocation4 + $0x198] sm:$0xff]
    %v1692 = vld [vmem:[#allocation4 + $0x1a0] sm:$0xff]
    %v1693 = vld [vmem:[#allocation4 + $0x1a8] sm:$0xff]
    %v1694 = vld [vmem:[#allocation4 + $0x1b0] sm:$0xff]
    %v1695 = vld [vmem:[#allocation4 + $0x1b8] sm:$0xff]
    %v1696 = vld [vmem:[#allocation4 + $0x1c0] sm:$0xff]
    %v1697 = vld [vmem:[#allocation4 + $0x1c8] sm:$0xff]
    %v1698 = vld [vmem:[#allocation4 + $0x1d0] sm:$0xff]
    %v1699 = vld [vmem:[#allocation4 + $0x1d8] sm:$0xff]
    %v1700 = vld [vmem:[#allocation4 + $0x1e0] sm:$0xff]
    %v1701 = vld [vmem:[#allocation4 + $0x1e8] sm:$0xff]
    %v1702 = vld [vmem:[#allocation4 + $0x1f0] sm:$0xff]
    %v1703 = vld [vmem:[#allocation4 + $0x1f8] sm:$0xff]
    %v1704 = vld [vmem:[#allocation4 + $0x200] sm:$0xff]
    %v1705 = vld [vmem:[#allocation4 + $0x208] sm:$0xff]
    %v1706 = vld [vmem:[#allocation4 + $0x210] sm:$0xff]
    %v1707 = vld [vmem:[#allocation4 + $0x218] sm:$0xff]
    %v1708 = vld [vmem:[#allocation4 + $0x220] sm:$0xff]
    %v1709 = vld [vmem:[#allocation4 + $0x228] sm:$0xff]
    %v1710 = vld [vmem:[#allocation4 + $0x230] sm:$0xff]
    %v1711 = vld [vmem:[#allocation4 + $0x238] sm:$0xff]
    %v1712 = vld [vmem:[#allocation4 + $0x240] sm:$0xff]
    %v1713 = vld [vmem:[#allocation4 + $0x248] sm:$0xff]
    %v1714 = vld [vmem:[#allocation4 + $0x250] sm:$0xff]
    %v1715 = vld [vmem:[#allocation4 + $0x258] sm:$0xff]
    %v1716 = vld [vmem:[#allocation4 + $0x260] sm:$0xff]
    %v1717 = vld [vmem:[#allocation4 + $0x268] sm:$0xff]
    %v1718 = vld [vmem:[#allocation4 + $0x270] sm:$0xff]
    %v1719 = vld [vmem:[#allocation4 + $0x278] sm:$0xff]
    %v1720 = vld [vmem:[#allocation4 + $0x280] sm:$0xff]
    %v1721 = vld [vmem:[#allocation4 + $0x288] sm:$0xff]
    %v1722 = vld [vmem:[#allocation4 + $0x290] sm:$0xff]
    %v1723 = vld [vmem:[#allocation4 + $0x298] sm:$0xff]
    %v1724 = vld [vmem:[#allocation4 + $0x2a0] sm:$0xff]
    %v1725 = vld [vmem:[#allocation4 + $0x2a8] sm:$0xff]
    %v1726 = vld [vmem:[#allocation4 + $0x2b0] sm:$0xff]
    %v1727 = vld [vmem:[#allocation4 + $0x2b8] sm:$0xff]
    %v1728 = vld [vmem:[#allocation4 + $0x2c0] sm:$0xff]
    %v1729 = vld [vmem:[#allocation4 + $0x2c8] sm:$0xff]
    %v1730 = vld [vmem:[#allocation4 + $0x2d0] sm:$0xff]
    %v1731 = vld [vmem:[#allocation4 + $0x2d8] sm:$0xff]
    %v1732 = vld [vmem:[#allocation4 + $0x2e0] sm:$0xff]
    %v1733 = vld [vmem:[#allocation4 + $0x2e8] sm:$0xff]
    %v1734 = vld [vmem:[#allocation4 + $0x2f0] sm:$0xff]
    %v1735 = vld [vmem:[#allocation4 + $0x2f8] sm:$0xff]
    %v1736 = vld [vmem:[#allocation4 + $0x300] sm:$0xff]
    %v1737 = vld [vmem:[#allocation4 + $0x308] sm:$0xff]
    %v1738 = vld [vmem:[#allocation4 + $0x310] sm:$0xff]
    %v1739 = vld [vmem:[#allocation4 + $0x318] sm:$0xff]
    %v1740 = vld [vmem:[#allocation4 + $0x320] sm:$0xff]
    %v1741 = vld [vmem:[#allocation4 + $0x328] sm:$0xff]
    %v1742 = vld [vmem:[#allocation4 + $0x330] sm:$0xff]
    %v1743 = vld [vmem:[#allocation4 + $0x338] sm:$0xff]
    %v1744 = vld [vmem:[#allocation4 + $0x340] sm:$0xff]
    %v1745 = vld [vmem:[#allocation4 + $0x348] sm:$0xff]
    %v1746 = vld [vmem:[#allocation4 + $0x350] sm:$0xff]
    %v1747 = vld [vmem:[#allocation4 + $0x358] sm:$0xff]
    %v1748 = vld [vmem:[#allocation4 + $0x360] sm:$0xff]
    %v1749 = vld [vmem:[#allocation4 + $0x368] sm:$0xff]
    %v1750 = vld [vmem:[#allocation4 + $0x370] sm:$0xff]
    %v1751 = vld [vmem:[#allocation4 + $0x378] sm:$0xff]
    %v1752 = vld [vmem:[#allocation4 + $0x380] sm:$0xff]
    %v1753 = vld [vmem:[#allocation4 + $0x388] sm:$0xff]
    %v1754 = vld [vmem:[#allocation4 + $0x390] sm:$0xff]
    %v1755 = vld [vmem:[#allocation4 + $0x398] sm:$0xff]
    %v1756 = vld [vmem:[#allocation4 + $0x3a0] sm:$0xff]
    %v1757 = vld [vmem:[#allocation4 + $0x3a8] sm:$0xff]
    %v1758 = vld [vmem:[#allocation4 + $0x3b0] sm:$0xff]
    %v1759 = vld [vmem:[#allocation4 + $0x3b8] sm:$0xff]
    %v1760 = vld [vmem:[#allocation4 + $0x3c0] sm:$0xff]
    %v1761 = vld [vmem:[#allocation4 + $0x3c8] sm:$0xff]
    %v1762 = vld [vmem:[#allocation4 + $0x3d0] sm:$0xff]
    %v1763 = vld [vmem:[#allocation4 + $0x3d8] sm:$0xff]
    %v1764 = vld [vmem:[#allocation4 + $0x3e0] sm:$0xff]
    %v1765 = vld [vmem:[#allocation4 + $0x3e8] sm:$0xff]
    %v1766 = vld [vmem:[#allocation4 + $0x3f0] sm:$0xff]
    %v1767 = vld [vmem:[#allocation4 + $0x3f8] sm:$0xff]
    %v1768 = vld [vmem:[%s4] sm:$0xf]
    %v1769 = vunpack.c.l.bf16 %v1768
    %v1771 = vperm.slane %v1769, 0
    %v1772 = vperm.slane %v1769, 2
    %v1773 = vperm.slane %v1769, 4
    %v1774 = vperm.slane %v1769, 6
    %v1779 = vperm.slane %v1771, 0
    %v1780 = vperm.slane %v1772, 0
    %v1781 = vperm.slane %v1773, 0
    %v1782 = vperm.slane %v1774, 0
    %v1911 = vunpack.c.l.b16 %v1640
    %v1912 = vunpack.c.h.b16 %v1640
    %v1913 = vunpack.c.l.b16 %v1641
    %v1914 = vunpack.c.h.b16 %v1641
    %v1915 = vunpack.c.l.b16 %v1642
    %v1916 = vunpack.c.h.b16 %v1642
    %v1917 = vunpack.c.l.b16 %v1643
    %v1918 = vunpack.c.h.b16 %v1643
    %v1919 = vunpack.c.l.b16 %v1644
    %v1920 = vunpack.c.h.b16 %v1644
    %v1921 = vunpack.c.l.b16 %v1645
    %v1922 = vunpack.c.h.b16 %v1645
    %v1923 = vunpack.c.l.b16 %v1646
    %v1924 = vunpack.c.h.b16 %v1646
    %v1925 = vunpack.c.l.b16 %v1647
    %v1926 = vunpack.c.h.b16 %v1647
    %v1927 = vunpack.c.l.b16 %v1648
    %v1928 = vunpack.c.h.b16 %v1648
    %v1929 = vunpack.c.l.b16 %v1649
    %v1930 = vunpack.c.h.b16 %v1649
    %v1931 = vunpack.c.l.b16 %v1650
    %v1932 = vunpack.c.h.b16 %v1650
    %v1933 = vunpack.c.l.b16 %v1651
    %v1934 = vunpack.c.h.b16 %v1651
    %v1935 = vunpack.c.l.b16 %v1652
    %v1936 = vunpack.c.h.b16 %v1652
    %v1937 = vunpack.c.l.b16 %v1653
    %v1938 = vunpack.c.h.b16 %v1653
    %v1939 = vunpack.c.l.b16 %v1654
    %v1940 = vunpack.c.h.b16 %v1654
    %v1941 = vunpack.c.l.b16 %v1655
    %v1942 = vunpack.c.h.b16 %v1655
    %v1943 = vunpack.c.l.b16 %v1656
    %v1944 = vunpack.c.h.b16 %v1656
    %v1945 = vunpack.c.l.b16 %v1657
    %v1946 = vunpack.c.h.b16 %v1657
    %v1947 = vunpack.c.l.b16 %v1658
    %v1948 = vunpack.c.h.b16 %v1658
    %v1949 = vunpack.c.l.b16 %v1659
    %v1950 = vunpack.c.h.b16 %v1659
    %v1951 = vunpack.c.l.b16 %v1660
    %v1952 = vunpack.c.h.b16 %v1660
    %v1953 = vunpack.c.l.b16 %v1661
    %v1954 = vunpack.c.h.b16 %v1661
    %v1955 = vunpack.c.l.b16 %v1662
    %v1956 = vunpack.c.h.b16 %v1662
    %v1957 = vunpack.c.l.b16 %v1663
    %v1958 = vunpack.c.h.b16 %v1663
    %v1959 = vunpack.c.l.b16 %v1664
    %v1960 = vunpack.c.h.b16 %v1664
    %v1961 = vunpack.c.l.b16 %v1665
    %v1962 = vunpack.c.h.b16 %v1665
    %v1963 = vunpack.c.l.b16 %v1666
    %v1964 = vunpack.c.h.b16 %v1666
    %v1965 = vunpack.c.l.b16 %v1667
    %v1966 = vunpack.c.h.b16 %v1667
    %v1967 = vunpack.c.l.b16 %v1668
    %v1968 = vunpack.c.h.b16 %v1668
    %v1969 = vunpack.c.l.b16 %v1669
    %v1970 = vunpack.c.h.b16 %v1669
    %v1971 = vunpack.c.l.b16 %v1670
    %v1972 = vunpack.c.h.b16 %v1670
    %v1973 = vunpack.c.l.b16 %v1671
    %v1974 = vunpack.c.h.b16 %v1671
    %v1975 = vunpack.c.l.b16 %v1672
    %v1976 = vunpack.c.h.b16 %v1672
    %v1977 = vunpack.c.l.b16 %v1673
    %v1978 = vunpack.c.h.b16 %v1673
    %v1979 = vunpack.c.l.b16 %v1674
    %v1980 = vunpack.c.h.b16 %v1674
    %v1981 = vunpack.c.l.b16 %v1675
    %v1982 = vunpack.c.h.b16 %v1675
    %v1983 = vunpack.c.l.b16 %v1676
    %v1984 = vunpack.c.h.b16 %v1676
    %v1985 = vunpack.c.l.b16 %v1677
    %v1986 = vunpack.c.h.b16 %v1677
    %v1987 = vunpack.c.l.b16 %v1678
    %v1988 = vunpack.c.h.b16 %v1678
    %v1989 = vunpack.c.l.b16 %v1679
    %v1990 = vunpack.c.h.b16 %v1679
    %v1991 = vunpack.c.l.b16 %v1680
    %v1992 = vunpack.c.h.b16 %v1680
    %v1993 = vunpack.c.l.b16 %v1681
    %v1994 = vunpack.c.h.b16 %v1681
    %v1995 = vunpack.c.l.b16 %v1682
    %v1996 = vunpack.c.h.b16 %v1682
    %v1997 = vunpack.c.l.b16 %v1683
    %v1998 = vunpack.c.h.b16 %v1683
    %v1999 = vunpack.c.l.b16 %v1684
    %v2000 = vunpack.c.h.b16 %v1684
    %v2001 = vunpack.c.l.b16 %v1685
    %v2002 = vunpack.c.h.b16 %v1685
    %v2003 = vunpack.c.l.b16 %v1686
    %v2004 = vunpack.c.h.b16 %v1686
    %v2005 = vunpack.c.l.b16 %v1687
    %v2006 = vunpack.c.h.b16 %v1687
    %v2007 = vunpack.c.l.b16 %v1688
    %v2008 = vunpack.c.h.b16 %v1688
    %v2009 = vunpack.c.l.b16 %v1689
    %v2010 = vunpack.c.h.b16 %v1689
    %v2011 = vunpack.c.l.b16 %v1690
    %v2012 = vunpack.c.h.b16 %v1690
    %v2013 = vunpack.c.l.b16 %v1691
    %v2014 = vunpack.c.h.b16 %v1691
    %v2015 = vunpack.c.l.b16 %v1692
    %v2016 = vunpack.c.h.b16 %v1692
    %v2017 = vunpack.c.l.b16 %v1693
    %v2018 = vunpack.c.h.b16 %v1693
    %v2019 = vunpack.c.l.b16 %v1694
    %v2020 = vunpack.c.h.b16 %v1694
    %v2021 = vunpack.c.l.b16 %v1695
    %v2022 = vunpack.c.h.b16 %v1695
    %v2023 = vunpack.c.l.b16 %v1696
    %v2024 = vunpack.c.h.b16 %v1696
    %v2025 = vunpack.c.l.b16 %v1697
    %v2026 = vunpack.c.h.b16 %v1697
    %v2027 = vunpack.c.l.b16 %v1698
    %v2028 = vunpack.c.h.b16 %v1698
    %v2029 = vunpack.c.l.b16 %v1699
    %v2030 = vunpack.c.h.b16 %v1699
    %v2031 = vunpack.c.l.b16 %v1700
    %v2032 = vunpack.c.h.b16 %v1700
    %v2033 = vunpack.c.l.b16 %v1701
    %v2034 = vunpack.c.h.b16 %v1701
    %v2035 = vunpack.c.l.b16 %v1702
    %v2036 = vunpack.c.h.b16 %v1702
    %v2037 = vunpack.c.l.b16 %v1703
    %v2038 = vunpack.c.h.b16 %v1703
    %v2039 = vunpack.c.l.b16 %v1704
    %v2040 = vunpack.c.h.b16 %v1704
    %v2041 = vunpack.c.l.b16 %v1705
    %v2042 = vunpack.c.h.b16 %v1705
    %v2043 = vunpack.c.l.b16 %v1706
    %v2044 = vunpack.c.h.b16 %v1706
    %v2045 = vunpack.c.l.b16 %v1707
    %v2046 = vunpack.c.h.b16 %v1707
    %v2047 = vunpack.c.l.b16 %v1708
    %v2048 = vunpack.c.h.b16 %v1708
    %v2049 = vunpack.c.l.b16 %v1709
    %v2050 = vunpack.c.h.b16 %v1709
    %v2051 = vunpack.c.l.b16 %v1710
    %v2052 = vunpack.c.h.b16 %v1710
    %v2053 = vunpack.c.l.b16 %v1711
    %v2054 = vunpack.c.h.b16 %v1711
    %v2055 = vunpack.c.l.b16 %v1712
    %v2056 = vunpack.c.h.b16 %v1712
    %v2057 = vunpack.c.l.b16 %v1713
    %v2058 = vunpack.c.h.b16 %v1713
    %v2059 = vunpack.c.l.b16 %v1714
    %v2060 = vunpack.c.h.b16 %v1714
    %v2061 = vunpack.c.l.b16 %v1715
    %v2062 = vunpack.c.h.b16 %v1715
    %v2063 = vunpack.c.l.b16 %v1716
    %v2064 = vunpack.c.h.b16 %v1716
    %v2065 = vunpack.c.l.b16 %v1717
    %v2066 = vunpack.c.h.b16 %v1717
    %v2067 = vunpack.c.l.b16 %v1718
    %v2068 = vunpack.c.h.b16 %v1718
    %v2069 = vunpack.c.l.b16 %v1719
    %v2070 = vunpack.c.h.b16 %v1719
    %v2071 = vunpack.c.l.b16 %v1720
    %v2072 = vunpack.c.h.b16 %v1720
    %v2073 = vunpack.c.l.b16 %v1721
    %v2074 = vunpack.c.h.b16 %v1721
    %v2075 = vunpack.c.l.b16 %v1722
    %v2076 = vunpack.c.h.b16 %v1722
    %v2077 = vunpack.c.l.b16 %v1723
    %v2078 = vunpack.c.h.b16 %v1723
    %v2079 = vunpack.c.l.b16 %v1724
    %v2080 = vunpack.c.h.b16 %v1724
    %v2081 = vunpack.c.l.b16 %v1725
    %v2082 = vunpack.c.h.b16 %v1725
    %v2083 = vunpack.c.l.b16 %v1726
    %v2084 = vunpack.c.h.b16 %v1726
    %v2085 = vunpack.c.l.b16 %v1727
    %v2086 = vunpack.c.h.b16 %v1727
    %v2087 = vunpack.c.l.b16 %v1728
    %v2088 = vunpack.c.h.b16 %v1728
    %v2089 = vunpack.c.l.b16 %v1729
    %v2090 = vunpack.c.h.b16 %v1729
    %v2091 = vunpack.c.l.b16 %v1730
    %v2092 = vunpack.c.h.b16 %v1730
    %v2093 = vunpack.c.l.b16 %v1731
    %v2094 = vunpack.c.h.b16 %v1731
    %v2095 = vunpack.c.l.b16 %v1732
    %v2096 = vunpack.c.h.b16 %v1732
    %v2097 = vunpack.c.l.b16 %v1733
    %v2098 = vunpack.c.h.b16 %v1733
    %v2099 = vunpack.c.l.b16 %v1734
    %v2100 = vunpack.c.h.b16 %v1734
    %v2101 = vunpack.c.l.b16 %v1735
    %v2102 = vunpack.c.h.b16 %v1735
    %v2103 = vunpack.c.l.b16 %v1736
    %v2104 = vunpack.c.h.b16 %v1736
    %v2105 = vunpack.c.l.b16 %v1737
    %v2106 = vunpack.c.h.b16 %v1737
    %v2107 = vunpack.c.l.b16 %v1738
    %v2108 = vunpack.c.h.b16 %v1738
    %v2109 = vunpack.c.l.b16 %v1739
    %v2110 = vunpack.c.h.b16 %v1739
    %v2111 = vunpack.c.l.b16 %v1740
    %v2112 = vunpack.c.h.b16 %v1740
    %v2113 = vunpack.c.l.b16 %v1741
    %v2114 = vunpack.c.h.b16 %v1741
    %v2115 = vunpack.c.l.b16 %v1742
    %v2116 = vunpack.c.h.b16 %v1742
    %v2117 = vunpack.c.l.b16 %v1743
    %v2118 = vunpack.c.h.b16 %v1743
    %v2119 = vunpack.c.l.b16 %v1744
    %v2120 = vunpack.c.h.b16 %v1744
    %v2121 = vunpack.c.l.b16 %v1745
    %v2122 = vunpack.c.h.b16 %v1745
    %v2123 = vunpack.c.l.b16 %v1746
    %v2124 = vunpack.c.h.b16 %v1746
    %v2125 = vunpack.c.l.b16 %v1747
    %v2126 = vunpack.c.h.b16 %v1747
    %v2127 = vunpack.c.l.b16 %v1748
    %v2128 = vunpack.c.h.b16 %v1748
    %v2129 = vunpack.c.l.b16 %v1749
    %v2130 = vunpack.c.h.b16 %v1749
    %v2131 = vunpack.c.l.b16 %v1750
    %v2132 = vunpack.c.h.b16 %v1750
    %v2133 = vunpack.c.l.b16 %v1751
    %v2134 = vunpack.c.h.b16 %v1751
    %v2135 = vunpack.c.l.b16 %v1752
    %v2136 = vunpack.c.h.b16 %v1752
    %v2137 = vunpack.c.l.b16 %v1753
    %v2138 = vunpack.c.h.b16 %v1753
    %v2139 = vunpack.c.l.b16 %v1754
    %v2140 = vunpack.c.h.b16 %v1754
    %v2141 = vunpack.c.l.b16 %v1755
    %v2142 = vunpack.c.h.b16 %v1755
    %v2143 = vunpack.c.l.b16 %v1756
    %v2144 = vunpack.c.h.b16 %v1756
    %v2145 = vunpack.c.l.b16 %v1757
    %v2146 = vunpack.c.h.b16 %v1757
    %v2147 = vunpack.c.l.b16 %v1758
    %v2148 = vunpack.c.h.b16 %v1758
    %v2149 = vunpack.c.l.b16 %v1759
    %v2150 = vunpack.c.h.b16 %v1759
    %v2151 = vunpack.c.l.b16 %v1760
    %v2152 = vunpack.c.h.b16 %v1760
    %v2153 = vunpack.c.l.b16 %v1761
    %v2154 = vunpack.c.h.b16 %v1761
    %v2155 = vunpack.c.l.b16 %v1762
    %v2156 = vunpack.c.h.b16 %v1762
    %v2157 = vunpack.c.l.b16 %v1763
    %v2158 = vunpack.c.h.b16 %v1763
    %v2159 = vunpack.c.l.b16 %v1764
    %v2160 = vunpack.c.h.b16 %v1764
    %v2161 = vunpack.c.l.b16 %v1765
    %v2162 = vunpack.c.h.b16 %v1765
    %v2163 = vunpack.c.l.b16 %v1766
    %v2164 = vunpack.c.h.b16 %v1766
    %v2165 = vunpack.c.l.b16 %v1767
    %v2166 = vunpack.c.h.b16 %v1767
    %v2167 = vpack.c.b16 %v1915, %v1911
    %v2168 = vpack.c.b16 %v1916, %v1912
    %v2169 = vpack.c.b16 %v1917, %v1913
    %v2170 = vpack.c.b16 %v1918, %v1914
    %v2171 = vpack.c.b16 %v1923, %v1919
    %v2172 = vpack.c.b16 %v1924, %v1920
    %v2173 = vpack.c.b16 %v1925, %v1921
    %v2174 = vpack.c.b16 %v1926, %v1922
    %v2175 = vpack.c.b16 %v1931, %v1927
    %v2176 = vpack.c.b16 %v1932, %v1928
    %v2177 = vpack.c.b16 %v1933, %v1929
    %v2178 = vpack.c.b16 %v1934, %v1930
    %v2179 = vpack.c.b16 %v1939, %v1935
    %v2180 = vpack.c.b16 %v1940, %v1936
    %v2181 = vpack.c.b16 %v1941, %v1937
    %v2182 = vpack.c.b16 %v1942, %v1938
    %v2183 = vpack.c.b16 %v1947, %v1943
    %v2184 = vpack.c.b16 %v1948, %v1944
    %v2185 = vpack.c.b16 %v1949, %v1945
    %v2186 = vpack.c.b16 %v1950, %v1946
    %v2187 = vpack.c.b16 %v1955, %v1951
    %v2188 = vpack.c.b16 %v1956, %v1952
    %v2189 = vpack.c.b16 %v1957, %v1953
    %v2190 = vpack.c.b16 %v1958, %v1954
    %v2191 = vpack.c.b16 %v1963, %v1959
    %v2192 = vpack.c.b16 %v1964, %v1960
    %v2193 = vpack.c.b16 %v1965, %v1961
    %v2194 = vpack.c.b16 %v1966, %v1962
    %v2195 = vpack.c.b16 %v1971, %v1967
    %v2196 = vpack.c.b16 %v1972, %v1968
    %v2197 = vpack.c.b16 %v1973, %v1969
    %v2198 = vpack.c.b16 %v1974, %v1970
    %v2199 = vpack.c.b16 %v1979, %v1975
    %v2200 = vpack.c.b16 %v1980, %v1976
    %v2201 = vpack.c.b16 %v1981, %v1977
    %v2202 = vpack.c.b16 %v1982, %v1978
    %v2203 = vpack.c.b16 %v1987, %v1983
    %v2204 = vpack.c.b16 %v1988, %v1984
    %v2205 = vpack.c.b16 %v1989, %v1985
    %v2206 = vpack.c.b16 %v1990, %v1986
    %v2207 = vpack.c.b16 %v1995, %v1991
    %v2208 = vpack.c.b16 %v1996, %v1992
    %v2209 = vpack.c.b16 %v1997, %v1993
    %v2210 = vpack.c.b16 %v1998, %v1994
    %v2211 = vpack.c.b16 %v2003, %v1999
    %v2212 = vpack.c.b16 %v2004, %v2000
    %v2213 = vpack.c.b16 %v2005, %v2001
    %v2214 = vpack.c.b16 %v2006, %v2002
    %v2215 = vpack.c.b16 %v2011, %v2007
    %v2216 = vpack.c.b16 %v2012, %v2008
    %v2217 = vpack.c.b16 %v2013, %v2009
    %v2218 = vpack.c.b16 %v2014, %v2010
    %v2219 = vpack.c.b16 %v2019, %v2015
    %v2220 = vpack.c.b16 %v2020, %v2016
    %v2221 = vpack.c.b16 %v2021, %v2017
    %v2222 = vpack.c.b16 %v2022, %v2018
    %v2223 = vpack.c.b16 %v2027, %v2023
    %v2224 = vpack.c.b16 %v2028, %v2024
    %v2225 = vpack.c.b16 %v2029, %v2025
    %v2226 = vpack.c.b16 %v2030, %v2026
    %v2227 = vpack.c.b16 %v2035, %v2031
    %v2228 = vpack.c.b16 %v2036, %v2032
    %v2229 = vpack.c.b16 %v2037, %v2033
    %v2230 = vpack.c.b16 %v2038, %v2034
    %v2231 = vpack.c.b16 %v2043, %v2039
    %v2232 = vpack.c.b16 %v2044, %v2040
    %v2233 = vpack.c.b16 %v2045, %v2041
    %v2234 = vpack.c.b16 %v2046, %v2042
    %v2235 = vpack.c.b16 %v2051, %v2047
    %v2236 = vpack.c.b16 %v2052, %v2048
    %v2237 = vpack.c.b16 %v2053, %v2049
    %v2238 = vpack.c.b16 %v2054, %v2050
    %v2239 = vpack.c.b16 %v2059, %v2055
    %v2240 = vpack.c.b16 %v2060, %v2056
    %v2241 = vpack.c.b16 %v2061, %v2057
    %v2242 = vpack.c.b16 %v2062, %v2058
    %v2243 = vpack.c.b16 %v2067, %v2063
    %v2244 = vpack.c.b16 %v2068, %v2064
    %v2245 = vpack.c.b16 %v2069, %v2065
    %v2246 = vpack.c.b16 %v2070, %v2066
    %v2247 = vpack.c.b16 %v2075, %v2071
    %v2248 = vpack.c.b16 %v2076, %v2072
    %v2249 = vpack.c.b16 %v2077, %v2073
    %v2250 = vpack.c.b16 %v2078, %v2074
    %v2251 = vpack.c.b16 %v2083, %v2079
    %v2252 = vpack.c.b16 %v2084, %v2080
    %v2253 = vpack.c.b16 %v2085, %v2081
    %v2254 = vpack.c.b16 %v2086, %v2082
    %v2255 = vpack.c.b16 %v2091, %v2087
    %v2256 = vpack.c.b16 %v2092, %v2088
    %v2257 = vpack.c.b16 %v2093, %v2089
    %v2258 = vpack.c.b16 %v2094, %v2090
    %v2259 = vpack.c.b16 %v2099, %v2095
    %v2260 = vpack.c.b16 %v2100, %v2096
    %v2261 = vpack.c.b16 %v2101, %v2097
    %v2262 = vpack.c.b16 %v2102, %v2098
    %v2263 = vpack.c.b16 %v2107, %v2103
    %v2264 = vpack.c.b16 %v2108, %v2104
    %v2265 = vpack.c.b16 %v2109, %v2105
    %v2266 = vpack.c.b16 %v2110, %v2106
    %v2267 = vpack.c.b16 %v2115, %v2111
    %v2268 = vpack.c.b16 %v2116, %v2112
    %v2269 = vpack.c.b16 %v2117, %v2113
    %v2270 = vpack.c.b16 %v2118, %v2114
    %v2271 = vpack.c.b16 %v2123, %v2119
    %v2272 = vpack.c.b16 %v2124, %v2120
    %v2273 = vpack.c.b16 %v2125, %v2121
    %v2274 = vpack.c.b16 %v2126, %v2122
    %v2275 = vpack.c.b16 %v2131, %v2127
    %v2276 = vpack.c.b16 %v2132, %v2128
    %v2277 = vpack.c.b16 %v2133, %v2129
    %v2278 = vpack.c.b16 %v2134, %v2130
    %v2279 = vpack.c.b16 %v2139, %v2135
    %v2280 = vpack.c.b16 %v2140, %v2136
    %v2281 = vpack.c.b16 %v2141, %v2137
    %v2282 = vpack.c.b16 %v2142, %v2138
    %v2283 = vpack.c.b16 %v2147, %v2143
    %v2284 = vpack.c.b16 %v2148, %v2144
    %v2285 = vpack.c.b16 %v2149, %v2145
    %v2286 = vpack.c.b16 %v2150, %v2146
    %v2287 = vpack.c.b16 %v2155, %v2151
    %v2288 = vpack.c.b16 %v2156, %v2152
    %v2289 = vpack.c.b16 %v2157, %v2153
    %v2290 = vpack.c.b16 %v2158, %v2154
    %v2291 = vpack.c.b16 %v2163, %v2159
    %v2292 = vpack.c.b16 %v2164, %v2160
    %v2293 = vpack.c.b16 %v2165, %v2161
    %v2294 = vpack.c.b16 %v2166, %v2162
    %2423 = vmatpush.bf16.msra.mxu0 %v2195
    %2424 = vmatpush.bf16.msra.mxu0 %v2191
    %2425 = vmatpush.bf16.msra.mxu0 %v2187
    %2426 = vmatpush.bf16.msra.mxu0 %v2183
    %2427 = vmatpush.bf16.msra.mxu0 %v2179
    %2428 = vmatpush.bf16.msra.mxu0 %v2175
    %2429 = vmatpush.bf16.msra.mxu0 %v2171
    %2430 = vmatpush.bf16.msra.mxu0 %v2167
    %2431 = vmatmul.bf16.gmra.mxu0 %v1636
    %v2432 = vpop.f32.mrf.mxu0
    %v2433 = vadd.f32 %v1779, %v2432
    %v2434 = vpop.f32.mrf.mxu0
    %2435 = vdwg.mxu0
    %2436 = vmatpush.bf16.msra.mxu0 %v2227
    %2437 = vmatpush.bf16.msra.mxu0 %v2223
    %2438 = vmatpush.bf16.msra.mxu0 %v2219
    %2439 = vmatpush.bf16.msra.mxu0 %v2215
    %2440 = vmatpush.bf16.msra.mxu0 %v2211
    %2441 = vmatpush.bf16.msra.mxu0 %v2207
    %2442 = vmatpush.bf16.msra.mxu0 %v2203
    %2443 = vmatpush.bf16.msra.mxu0 %v2199
    %2444 = vmatmul.bf16.gmra.mxu0 %v1637
    %v2445 = vpop.f32.mrf.mxu0
    %v2446 = vadd.f32 %v2433, %v2445
    %v2447 = vpop.f32.mrf.mxu0
    %2448 = vdwg.mxu0
    %2449 = vmatpush.bf16.msra.mxu0 %v2259
    %2450 = vmatpush.bf16.msra.mxu0 %v2255
    %2451 = vmatpush.bf16.msra.mxu0 %v2251
    %2452 = vmatpush.bf16.msra.mxu0 %v2247
    %2453 = vmatpush.bf16.msra.mxu0 %v2243
    %2454 = vmatpush.bf16.msra.mxu0 %v2239
    %2455 = vmatpush.bf16.msra.mxu0 %v2235
    %2456 = vmatpush.bf16.msra.mxu0 %v2231
    %2457 = vmatmul.bf16.gmra.mxu0 %v1638
    %v2458 = vpop.f32.mrf.mxu0
    %v2459 = vadd.f32 %v2446, %v2458
    %v2460 = vpop.f32.mrf.mxu0
    %2461 = vdwg.mxu0
    %2462 = vmatpush.bf16.msra.mxu0 %v2291
    %2463 = vmatpush.bf16.msra.mxu0 %v2287
    %2464 = vmatpush.bf16.msra.mxu0 %v2283
    %2465 = vmatpush.bf16.msra.mxu0 %v2279
    %2466 = vmatpush.bf16.msra.mxu0 %v2275
    %2467 = vmatpush.bf16.msra.mxu0 %v2271
    %2468 = vmatpush.bf16.msra.mxu0 %v2267
    %2469 = vmatpush.bf16.msra.mxu0 %v2263
    %2470 = vmatmul.bf16.gmra.mxu0 %v1639
    %v2471 = vpop.f32.mrf.mxu0
    %v2472 = vadd.f32 %v2459, %v2471
    %v2473 = vpop.f32.mrf.mxu0
    %2474 = vdwg.mxu0
    %2475 = vmatpush.bf16.msra.mxu0 %v2196
    %2476 = vmatpush.bf16.msra.mxu0 %v2192
    %2477 = vmatpush.bf16.msra.mxu0 %v2188
    %2478 = vmatpush.bf16.msra.mxu0 %v2184
    %2479 = vmatpush.bf16.msra.mxu0 %v2180
    %2480 = vmatpush.bf16.msra.mxu0 %v2176
    %2481 = vmatpush.bf16.msra.mxu0 %v2172
    %2482 = vmatpush.bf16.msra.mxu0 %v2168
    %2483 = vmatmul.bf16.gmra.mxu0 %v1636
    %v2484 = vpop.f32.mrf.mxu0
    %v2485 = vadd.f32 %v1780, %v2484
    %v2486 = vpop.f32.mrf.mxu0
    %2487 = vdwg.mxu0
    %2488 = vmatpush.bf16.msra.mxu0 %v2228
    %2489 = vmatpush.bf16.msra.mxu0 %v2224
    %2490 = vmatpush.bf16.msra.mxu0 %v2220
    %2491 = vmatpush.bf16.msra.mxu0 %v2216
    %2492 = vmatpush.bf16.msra.mxu0 %v2212
    %2493 = vmatpush.bf16.msra.mxu0 %v2208
    %2494 = vmatpush.bf16.msra.mxu0 %v2204
    %2495 = vmatpush.bf16.msra.mxu0 %v2200
    %2496 = vmatmul.bf16.gmra.mxu0 %v1637
    %v2497 = vpop.f32.mrf.mxu0
    %v2498 = vadd.f32 %v2485, %v2497
    %v2499 = vpop.f32.mrf.mxu0
    %2500 = vdwg.mxu0
    %2501 = vmatpush.bf16.msra.mxu0 %v2260
    %2502 = vmatpush.bf16.msra.mxu0 %v2256
    %2503 = vmatpush.bf16.msra.mxu0 %v2252
    %2504 = vmatpush.bf16.msra.mxu0 %v2248
    %2505 = vmatpush.bf16.msra.mxu0 %v2244
    %2506 = vmatpush.bf16.msra.mxu0 %v2240
    %2507 = vmatpush.bf16.msra.mxu0 %v2236
    %2508 = vmatpush.bf16.msra.mxu0 %v2232
    %2509 = vmatmul.bf16.gmra.mxu0 %v1638
    %v2510 = vpop.f32.mrf.mxu0
    %v2511 = vadd.f32 %v2498, %v2510
    %v2512 = vpop.f32.mrf.mxu0
    %2513 = vdwg.mxu0
    %2514 = vmatpush.bf16.msra.mxu0 %v2292
    %2515 = vmatpush.bf16.msra.mxu0 %v2288
    %2516 = vmatpush.bf16.msra.mxu0 %v2284
    %2517 = vmatpush.bf16.msra.mxu0 %v2280
    %2518 = vmatpush.bf16.msra.mxu0 %v2276
    %2519 = vmatpush.bf16.msra.mxu0 %v2272
    %2520 = vmatpush.bf16.msra.mxu0 %v2268
    %2521 = vmatpush.bf16.msra.mxu0 %v2264
    %2522 = vmatmul.bf16.gmra.mxu0 %v1639
    %v2523 = vpop.f32.mrf.mxu0
    %v2524 = vadd.f32 %v2511, %v2523
    %v2525 = vpop.f32.mrf.mxu0
    %2526 = vdwg.mxu0
    %2527 = vmatpush.bf16.msra.mxu0 %v2197
    %2528 = vmatpush.bf16.msra.mxu0 %v2193
    %2529 = vmatpush.bf16.msra.mxu0 %v2189
    %2530 = vmatpush.bf16.msra.mxu0 %v2185
    %2531 = vmatpush.bf16.msra.mxu0 %v2181
    %2532 = vmatpush.bf16.msra.mxu0 %v2177
    %2533 = vmatpush.bf16.msra.mxu0 %v2173
    %2534 = vmatpush.bf16.msra.mxu0 %v2169
    %2535 = vmatmul.bf16.gmra.mxu0 %v1636
    %v2536 = vpop.f32.mrf.mxu0
    %v2537 = vadd.f32 %v1781, %v2536
    %v2538 = vpop.f32.mrf.mxu0
    %2539 = vdwg.mxu0
    %2540 = vmatpush.bf16.msra.mxu0 %v2229
    %2541 = vmatpush.bf16.msra.mxu0 %v2225
    %2542 = vmatpush.bf16.msra.mxu0 %v2221
    %2543 = vmatpush.bf16.msra.mxu0 %v2217
    %2544 = vmatpush.bf16.msra.mxu0 %v2213
    %2545 = vmatpush.bf16.msra.mxu0 %v2209
    %2546 = vmatpush.bf16.msra.mxu0 %v2205
    %2547 = vmatpush.bf16.msra.mxu0 %v2201
    %2548 = vmatmul.bf16.gmra.mxu0 %v1637
    %v2549 = vpop.f32.mrf.mxu0
    %v2550 = vadd.f32 %v2537, %v2549
    %v2551 = vpop.f32.mrf.mxu0
    %2552 = vdwg.mxu0
    %2553 = vmatpush.bf16.msra.mxu0 %v2261
    %2554 = vmatpush.bf16.msra.mxu0 %v2257
    %2555 = vmatpush.bf16.msra.mxu0 %v2253
    %2556 = vmatpush.bf16.msra.mxu0 %v2249
    %2557 = vmatpush.bf16.msra.mxu0 %v2245
    %2558 = vmatpush.bf16.msra.mxu0 %v2241
    %2559 = vmatpush.bf16.msra.mxu0 %v2237
    %2560 = vmatpush.bf16.msra.mxu0 %v2233
    %2561 = vmatmul.bf16.gmra.mxu0 %v1638
    %v2562 = vpop.f32.mrf.mxu0
    %v2563 = vadd.f32 %v2550, %v2562
    %v2564 = vpop.f32.mrf.mxu0
    %2565 = vdwg.mxu0
    %2566 = vmatpush.bf16.msra.mxu0 %v2293
    %2567 = vmatpush.bf16.msra.mxu0 %v2289
    %2568 = vmatpush.bf16.msra.mxu0 %v2285
    %2569 = vmatpush.bf16.msra.mxu0 %v2281
    %2570 = vmatpush.bf16.msra.mxu0 %v2277
    %2571 = vmatpush.bf16.msra.mxu0 %v2273
    %2572 = vmatpush.bf16.msra.mxu0 %v2269
    %2573 = vmatpush.bf16.msra.mxu0 %v2265
    %2574 = vmatmul.bf16.gmra.mxu0 %v1639
    %v2575 = vpop.f32.mrf.mxu0
    %v2576 = vadd.f32 %v2563, %v2575
    %v2577 = vpop.f32.mrf.mxu0
    %2578 = vdwg.mxu0
    %2579 = vmatpush.bf16.msra.mxu0 %v2198
    %2580 = vmatpush.bf16.msra.mxu0 %v2194
    %2581 = vmatpush.bf16.msra.mxu0 %v2190
    %2582 = vmatpush.bf16.msra.mxu0 %v2186
    %2583 = vmatpush.bf16.msra.mxu0 %v2182
    %2584 = vmatpush.bf16.msra.mxu0 %v2178
    %2585 = vmatpush.bf16.msra.mxu0 %v2174
    %2586 = vmatpush.bf16.msra.mxu0 %v2170
    %2587 = vmatmul.bf16.gmra.mxu0 %v1636
    %v2588 = vpop.f32.mrf.mxu0
    %v2589 = vadd.f32 %v1782, %v2588
    %v2590 = vpop.f32.mrf.mxu0
    %2591 = vdwg.mxu0
    %2592 = vmatpush.bf16.msra.mxu0 %v2230
    %2593 = vmatpush.bf16.msra.mxu0 %v2226
    %2594 = vmatpush.bf16.msra.mxu0 %v2222
    %2595 = vmatpush.bf16.msra.mxu0 %v2218
    %2596 = vmatpush.bf16.msra.mxu0 %v2214
    %2597 = vmatpush.bf16.msra.mxu0 %v2210
    %2598 = vmatpush.bf16.msra.mxu0 %v2206
    %2599 = vmatpush.bf16.msra.mxu0 %v2202
    %2600 = vmatmul.bf16.gmra.mxu0 %v1637
    %v2601 = vpop.f32.mrf.mxu0
    %v2602 = vadd.f32 %v2589, %v2601
    %v2603 = vpop.f32.mrf.mxu0
    %2604 = vdwg.mxu0
    %2605 = vmatpush.bf16.msra.mxu0 %v2262
    %2606 = vmatpush.bf16.msra.mxu0 %v2258
    %2607 = vmatpush.bf16.msra.mxu0 %v2254
    %2608 = vmatpush.bf16.msra.mxu0 %v2250
    %2609 = vmatpush.bf16.msra.mxu0 %v2246
    %2610 = vmatpush.bf16.msra.mxu0 %v2242
    %2611 = vmatpush.bf16.msra.mxu0 %v2238
    %2612 = vmatpush.bf16.msra.mxu0 %v2234
    %2613 = vmatmul.bf16.gmra.mxu0 %v1638
    %v2614 = vpop.f32.mrf.mxu0
    %v2615 = vadd.f32 %v2602, %v2614
    %v2616 = vpop.f32.mrf.mxu0
    %2617 = vdwg.mxu0
    %2618 = vmatpush.bf16.msra.mxu0 %v2294
    %2619 = vmatpush.bf16.msra.mxu0 %v2290
    %2620 = vmatpush.bf16.msra.mxu0 %v2286
    %2621 = vmatpush.bf16.msra.mxu0 %v2282
    %2622 = vmatpush.bf16.msra.mxu0 %v2278
    %2623 = vmatpush.bf16.msra.mxu0 %v2274
    %2624 = vmatpush.bf16.msra.mxu0 %v2270
    %2625 = vmatpush.bf16.msra.mxu0 %v2266
    %2626 = vmatmul.bf16.gmra.mxu0 %v1639
    %v2627 = vpop.f32.mrf.mxu0
    %v2628 = vadd.f32 %v2615, %v2627
    %v2629 = vpop.f32.mrf.mxu0
    %2630 = vdwg.mxu0
    %v2631 = vmax.f32 %v2472, 0.0
    %v2632 = vmax.f32 %v2524, 0.0
    %v2633 = vmax.f32 %v2576, 0.0
    %v2634 = vmax.f32 %v2628, 0.0
    %v2635 = vpack.c.bf16 %v2631, %v2631
    %v2636 = vpack.c.bf16 %v2632, %v2632
    %v2637 = vpack.c.bf16 %v2633, %v2633
    %v2638 = vpack.c.bf16 %v2634, %v2634
    %v2639 = vld [vmem:[%s5] sm:$0xf]
    %v2640 = vld [vmem:[%s5 + $0x4] sm:$0xf]
    %v2641 = vld [vmem:[%s5 + $0x8] sm:$0xf]
    %v2642 = vld [vmem:[%s5 + $0xc] sm:$0xf]
    %v2643 = vld [vmem:[%s5 + $0x10] sm:$0xf]
    %v2644 = vld [vmem:[%s5 + $0x14] sm:$0xf]
    %v2645 = vld [vmem:[%s5 + $0x18] sm:$0xf]
    %v2646 = vld [vmem:[%s5 + $0x1c] sm:$0xf]
    %v2647 = vld [vmem:[%s5 + $0x20] sm:$0xf]
    %v2648 = vld [vmem:[%s5 + $0x24] sm:$0xf]
    %v2649 = vld [vmem:[%s5 + $0x28] sm:$0xf]
    %v2650 = vld [vmem:[%s5 + $0x2c] sm:$0xf]
    %v2651 = vld [vmem:[%s5 + $0x30] sm:$0xf]
    %v2652 = vld [vmem:[%s5 + $0x34] sm:$0xf]
    %v2653 = vld [vmem:[%s5 + $0x38] sm:$0xf]
    %v2654 = vld [vmem:[%s5 + $0x3c] sm:$0xf]
    %v2655 = vld [vmem:[%s5 + $0x40] sm:$0xf]
    %v2656 = vld [vmem:[%s5 + $0x44] sm:$0xf]
    %v2657 = vld [vmem:[%s5 + $0x48] sm:$0xf]
    %v2658 = vld [vmem:[%s5 + $0x4c] sm:$0xf]
    %v2659 = vld [vmem:[%s5 + $0x50] sm:$0xf]
    %v2660 = vld [vmem:[%s5 + $0x54] sm:$0xf]
    %v2661 = vld [vmem:[%s5 + $0x58] sm:$0xf]
    %v2662 = vld [vmem:[%s5 + $0x5c] sm:$0xf]
    %v2663 = vld [vmem:[%s5 + $0x60] sm:$0xf]
    %v2664 = vld [vmem:[%s5 + $0x64] sm:$0xf]
    %v2665 = vld [vmem:[%s5 + $0x68] sm:$0xf]
    %v2666 = vld [vmem:[%s5 + $0x6c] sm:$0xf]
    %v2667 = vld [vmem:[%s5 + $0x70] sm:$0xf]
    %v2668 = vld [vmem:[%s5 + $0x74] sm:$0xf]
    %v2669 = vld [vmem:[%s5 + $0x78] sm:$0xf]
    %v2670 = vld [vmem:[%s5 + $0x7c] sm:$0xf]
    %v2671 = vld [vmem:[%s5 + $0x80] sm:$0xf]
    %v2672 = vld [vmem:[%s5 + $0x84] sm:$0xf]
    %v2673 = vld [vmem:[%s5 + $0x88] sm:$0xf]
    %v2674 = vld [vmem:[%s5 + $0x8c] sm:$0xf]
    %v2675 = vld [vmem:[%s5 + $0x90] sm:$0xf]
    %v2676 = vld [vmem:[%s5 + $0x94] sm:$0xf]
    %v2677 = vld [vmem:[%s5 + $0x98] sm:$0xf]
    %v2678 = vld [vmem:[%s5 + $0x9c] sm:$0xf]
    %v2679 = vld [vmem:[%s5 + $0xa0] sm:$0xf]
    %v2680 = vld [vmem:[%s5 + $0xa4] sm:$0xf]
    %v2681 = vld [vmem:[%s5 + $0xa8] sm:$0xf]
    %v2682 = vld [vmem:[%s5 + $0xac] sm:$0xf]
    %v2683 = vld [vmem:[%s5 + $0xb0] sm:$0xf]
    %v2684 = vld [vmem:[%s5 + $0xb4] sm:$0xf]
    %v2685 = vld [vmem:[%s5 + $0xb8] sm:$0xf]
    %v2686 = vld [vmem:[%s5 + $0xbc] sm:$0xf]
    %v2687 = vld [vmem:[%s5 + $0xc0] sm:$0xf]
    %v2688 = vld [vmem:[%s5 + $0xc4] sm:$0xf]
    %v2689 = vld [vmem:[%s5 + $0xc8] sm:$0xf]
    %v2690 = vld [vmem:[%s5 + $0xcc] sm:$0xf]
    %v2691 = vld [vmem:[%s5 + $0xd0] sm:$0xf]
    %v2692 = vld [vmem:[%s5 + $0xd4] sm:$0xf]
    %v2693 = vld [vmem:[%s5 + $0xd8] sm:$0xf]
    %v2694 = vld [vmem:[%s5 + $0xdc] sm:$0xf]
    %v2695 = vld [vmem:[%s5 + $0xe0] sm:$0xf]
    %v2696 = vld [vmem:[%s5 + $0xe4] sm:$0xf]
    %v2697 = vld [vmem:[%s5 + $0xe8] sm:$0xf]
    %v2698 = vld [vmem:[%s5 + $0xec] sm:$0xf]
    %v2699 = vld [vmem:[%s5 + $0xf0] sm:$0xf]
    %v2700 = vld [vmem:[%s5 + $0xf4] sm:$0xf]
    %v2701 = vld [vmem:[%s5 + $0xf8] sm:$0xf]
    %v2702 = vld [vmem:[%s5 + $0xfc] sm:$0xf]
    %v2703 = vld [vmem:[%s6] sm:$0x1]
    %v2704 = vunpack.c.l.bf16 %v2703
    %v2705 = vperm.slane %v2704, 0
    %v2770 = vunpack.c.l.b16 %v2639
    %v2771 = vunpack.c.l.b16 %v2640
    %v2772 = vunpack.c.l.b16 %v2641
    %v2773 = vunpack.c.l.b16 %v2642
    %v2774 = vunpack.c.l.b16 %v2643
    %v2775 = vunpack.c.l.b16 %v2644
    %v2776 = vunpack.c.l.b16 %v2645
    %v2777 = vunpack.c.l.b16 %v2646
    %v2778 = vunpack.c.l.b16 %v2647
    %v2779 = vunpack.c.l.b16 %v2648
    %v2780 = vunpack.c.l.b16 %v2649
    %v2781 = vunpack.c.l.b16 %v2650
    %v2782 = vunpack.c.l.b16 %v2651
    %v2783 = vunpack.c.l.b16 %v2652
    %v2784 = vunpack.c.l.b16 %v2653
    %v2785 = vunpack.c.l.b16 %v2654
    %v2786 = vunpack.c.l.b16 %v2655
    %v2787 = vunpack.c.l.b16 %v2656
    %v2788 = vunpack.c.l.b16 %v2657
    %v2789 = vunpack.c.l.b16 %v2658
    %v2790 = vunpack.c.l.b16 %v2659
    %v2791 = vunpack.c.l.b16 %v2660
    %v2792 = vunpack.c.l.b16 %v2661
    %v2793 = vunpack.c.l.b16 %v2662
    %v2794 = vunpack.c.l.b16 %v2663
    %v2795 = vunpack.c.l.b16 %v2664
    %v2796 = vunpack.c.l.b16 %v2665
    %v2797 = vunpack.c.l.b16 %v2666
    %v2798 = vunpack.c.l.b16 %v2667
    %v2799 = vunpack.c.l.b16 %v2668
    %v2800 = vunpack.c.l.b16 %v2669
    %v2801 = vunpack.c.l.b16 %v2670
    %v2802 = vunpack.c.l.b16 %v2671
    %v2803 = vunpack.c.l.b16 %v2672
    %v2804 = vunpack.c.l.b16 %v2673
    %v2805 = vunpack.c.l.b16 %v2674
    %v2806 = vunpack.c.l.b16 %v2675
    %v2807 = vunpack.c.l.b16 %v2676
    %v2808 = vunpack.c.l.b16 %v2677
    %v2809 = vunpack.c.l.b16 %v2678
    %v2810 = vunpack.c.l.b16 %v2679
    %v2811 = vunpack.c.l.b16 %v2680
    %v2812 = vunpack.c.l.b16 %v2681
    %v2813 = vunpack.c.l.b16 %v2682
    %v2814 = vunpack.c.l.b16 %v2683
    %v2815 = vunpack.c.l.b16 %v2684
    %v2816 = vunpack.c.l.b16 %v2685
    %v2817 = vunpack.c.l.b16 %v2686
    %v2818 = vunpack.c.l.b16 %v2687
    %v2819 = vunpack.c.l.b16 %v2688
    %v2820 = vunpack.c.l.b16 %v2689
    %v2821 = vunpack.c.l.b16 %v2690
    %v2822 = vunpack.c.l.b16 %v2691
    %v2823 = vunpack.c.l.b16 %v2692
    %v2824 = vunpack.c.l.b16 %v2693
    %v2825 = vunpack.c.l.b16 %v2694
    %v2826 = vunpack.c.l.b16 %v2695
    %v2827 = vunpack.c.l.b16 %v2696
    %v2828 = vunpack.c.l.b16 %v2697
    %v2829 = vunpack.c.l.b16 %v2698
    %v2830 = vunpack.c.l.b16 %v2699
    %v2831 = vunpack.c.l.b16 %v2700
    %v2832 = vunpack.c.l.b16 %v2701
    %v2833 = vunpack.c.l.b16 %v2702
    %v2834 = vpack.c.b16 %v2771, %v2770
    %v2835 = vpack.c.b16 %v2773, %v2772
    %v2836 = vpack.c.b16 %v2775, %v2774
    %v2837 = vpack.c.b16 %v2777, %v2776
    %v2838 = vpack.c.b16 %v2779, %v2778
    %v2839 = vpack.c.b16 %v2781, %v2780
    %v2840 = vpack.c.b16 %v2783, %v2782
    %v2841 = vpack.c.b16 %v2785, %v2784
    %v2842 = vpack.c.b16 %v2787, %v2786
    %v2843 = vpack.c.b16 %v2789, %v2788
    %v2844 = vpack.c.b16 %v2791, %v2790
    %v2845 = vpack.c.b16 %v2793, %v2792
    %v2846 = vpack.c.b16 %v2795, %v2794
    %v2847 = vpack.c.b16 %v2797, %v2796
    %v2848 = vpack.c.b16 %v2799, %v2798
    %v2849 = vpack.c.b16 %v2801, %v2800
    %v2850 = vpack.c.b16 %v2803, %v2802
    %v2851 = vpack.c.b16 %v2805, %v2804
    %v2852 = vpack.c.b16 %v2807, %v2806
    %v2853 = vpack.c.b16 %v2809, %v2808
    %v2854 = vpack.c.b16 %v2811, %v2810
    %v2855 = vpack.c.b16 %v2813, %v2812
    %v2856 = vpack.c.b16 %v2815, %v2814
    %v2857 = vpack.c.b16 %v2817, %v2816
    %v2858 = vpack.c.b16 %v2819, %v2818
    %v2859 = vpack.c.b16 %v2821, %v2820
    %v2860 = vpack.c.b16 %v2823, %v2822
    %v2861 = vpack.c.b16 %v2825, %v2824
    %v2862 = vpack.c.b16 %v2827, %v2826
    %v2863 = vpack.c.b16 %v2829, %v2828
    %v2864 = vpack.c.b16 %v2831, %v2830
    %v2865 = vpack.c.b16 %v2833, %v2832
    %2898 = vmatpush.bf16.msra.mxu0 %v2841
    %2899 = vmatpush.bf16.msra.mxu0 %v2840
    %2900 = vmatpush.bf16.msra.mxu0 %v2839
    %2901 = vmatpush.bf16.msra.mxu0 %v2838
    %2902 = vmatpush.bf16.msra.mxu0 %v2837
    %2903 = vmatpush.bf16.msra.mxu0 %v2836
    %2904 = vmatpush.bf16.msra.mxu0 %v2835
    %2905 = vmatpush.bf16.msra.mxu0 %v2834
    %2906 = vmatmul.bf16.gmra.mxu0 %v2635
    %v2907 = vpop.f32.mrf.mxu0
    %v2908 = vadd.f32 %v2705, %v2907
    %v2909 = vpop.f32.mrf.mxu0
    %2910 = vdwg.mxu0
    %2911 = vmatpush.bf16.msra.mxu0 %v2849
    %2912 = vmatpush.bf16.msra.mxu0 %v2848
    %2913 = vmatpush.bf16.msra.mxu0 %v2847
    %2914 = vmatpush.bf16.msra.mxu0 %v2846
    %2915 = vmatpush.bf16.msra.mxu0 %v2845
    %2916 = vmatpush.bf16.msra.mxu0 %v2844
    %2917 = vmatpush.bf16.msra.mxu0 %v2843
    %2918 = vmatpush.bf16.msra.mxu0 %v2842
    %2919 = vmatmul.bf16.gmra.mxu0 %v2636
    %v2920 = vpop.f32.mrf.mxu0
    %v2921 = vadd.f32 %v2908, %v2920
    %v2922 = vpop.f32.mrf.mxu0
    %2923 = vdwg.mxu0
    %2924 = vmatpush.bf16.msra.mxu0 %v2857
    %2925 = vmatpush.bf16.msra.mxu0 %v2856
    %2926 = vmatpush.bf16.msra.mxu0 %v2855
    %2927 = vmatpush.bf16.msra.mxu0 %v2854
    %2928 = vmatpush.bf16.msra.mxu0 %v2853
    %2929 = vmatpush.bf16.msra.mxu0 %v2852
    %2930 = vmatpush.bf16.msra.mxu0 %v2851
    %2931 = vmatpush.bf16.msra.mxu0 %v2850
    %2932 = vmatmul.bf16.gmra.mxu0 %v2637
    %v2933 = vpop.f32.mrf.mxu0
    %v2934 = vadd.f32 %v2921, %v2933
    %v2935 = vpop.f32.mrf.mxu0
    %2936 = vdwg.mxu0
    %2937 = vmatpush.bf16.msra.mxu0 %v2865
    %2938 = vmatpush.bf16.msra.mxu0 %v2864
    %2939 = vmatpush.bf16.msra.mxu0 %v2863
    %2940 = vmatpush.bf16.msra.mxu0 %v2862
    %2941 = vmatpush.bf16.msra.mxu0 %v2861
    %2942 = vmatpush.bf16.msra.mxu0 %v2860
    %2943 = vmatpush.bf16.msra.mxu0 %v2859
    %2944 = vmatpush.bf16.msra.mxu0 %v2858
    %2945 = vmatmul.bf16.gmra.mxu0 %v2638
    %v2946 = vpop.f32.mrf.mxu0
    %v2947 = vadd.f32 %v2934, %v2946
    %v2948 = vpop.f32.mrf.mxu0
    %2949 = vdwg.mxu0
    %v2950 = vpack.c.bf16 %v2947, %v2947
    %2951 = vst [vmem:[%s7] sm:$0xf] %v2950
    // Predicated region
    $region38: #{neural_network_forward.1} parent=1 // pred_check
      _
    $region39: #{neural_network_forward.1} parent=1 // pred_check_branch
      %2953 = sbr.rel (0) target = $region41
    $region40: #{neural_network_forward.1} parent=1 // pred_region
      _
    $region41: #{neural_network_forward.1} parent=1 // pred_fallthru
      _
    // Predicated region
    $region42: #{neural_network_forward.1} parent=1 // pred_check
      _
    $region43: #{neural_network_forward.1} parent=1 // pred_check_branch
      %2955 = sbr.rel (0) target = $region45
    $region44: #{neural_network_forward.1} parent=1 // pred_region
      _
    $region45: #{neural_network_forward.1} parent=1 // pred_fallthru
      _
    %2956 = vsyncpa [#allocation3], 1
    %2957 = vsyncpa [#allocation5], 1

</llo_original>
